<compile_context>
chip_gen: v7x
topology: tpu7x:2x2x1
jax: 0.10.0
libtpu: 0.0.40
codegen_flags: <defaults>
</compile_context>

<pallas_src>
import jax
import jax.numpy as jnp
from jax.experimental import pallas as pl
from jax.experimental.pallas import tpu as pltpu

B = 2            # batch
C = 64           # in_dim (query/key project to C // 8)
W = 16
H = 16
N = W * H        # 256 spatial positions
CQ = C // 8      # 8

# lax.dot_general dimension numbers: contract dim0 of both operands -> Aᵀ @ B
TN = (((0,), (0,)), ((), ()))


def self_attention_kernel(gamma_ref, x_ref, w_ref, b_ref, out_ref, att_ref):
    bb, c, n = x_ref.shape                              # batch-block, channels, positions
    cq = (w_ref.shape[0] - c) // 2
    gamma = gamma_ref[0]                                # SMEM scalar
    w_bf = w_ref[...].astype(jnp.bfloat16)              # [2*CQ+C, C] stacked Wq/Wk/Wv
    bias = b_ref[...]                                   # [2*CQ+C, 1]

    for b in range(bb):                                 # static unroll (bb is 1 or B)
        x = x_ref[b]                                    # [C, N] f32
        # Single fused projection matmul (1x1 convs == channel matmuls), f32 accumulation.
        qkv = jnp.dot(w_bf, x.astype(jnp.bfloat16),
                      preferred_element_type=jnp.float32) + bias        # [2*CQ+C, N]
        q = qkv[0:cq].astype(jnp.bfloat16)              # [CQ, N]  (slices on 8-sublane bounds)
        k = qkv[cq:2 * cq].astype(jnp.bfloat16)         # [CQ, N]
        v = qkv[2 * cq:]                                # [C,  N]  f32
        # energy[i, j] = sum_c q[c, i] * k[c, j]   == bmm(proj_query, proj_key)
        energy = jax.lax.dot_general(q, k, TN, preferred_element_type=jnp.float32)  # [N, N]
        # softmax over the last (lane) axis; divide -> EUP reciprocal of the row sums.
        m = jnp.max(energy, axis=-1, keepdims=True)
        p = jnp.exp(energy - m)
        s = jnp.sum(p, axis=-1, keepdims=True)
        att_ref[b] = p * pl.reciprocal(s, approx=True)                   # softmax written in place
        # out[c, i] = sum_j v[c, j] * att[i, j]  == bmm(proj_value, attentionᵀ).
        # Computed as (att @ vᵀ)ᵀ: canonical MXU matmul, only the [C,N]/[N,C] tiles transposed.
        v_t = v.T.astype(jnp.bfloat16)                                   # [N, C]
        ov_t = jnp.dot(att_ref[b].astype(jnp.bfloat16), v_t,
                       preferred_element_type=jnp.float32)               # [N, C]
        out_ref[b] = gamma * ov_t.T + x


def _single_tensorcore_chip():
    """True on chips with one TensorCore per device (v5e / v6e): fold the batch
    into a single grid step there.  v7x / unknown chips keep the parallel batch
    grid (one image per TensorCore), which is always correct."""
    try:
        kind = jax.devices()[0].device_kind.lower()
    except Exception:
        return False
    return ("v5" in kind) or ("v6" in kind)


def self_attention_forward(x, params):
    bs, c, w, h = x.shape
    n = w * h
    cq = c // 8
    co = 2 * cq + c
    x_flat = x.reshape(bs, c, n)                         # free reshape (NCHW row-major)

    # Stack the three 1x1-conv weights/biases into one projection matrix.
    w_qkv = jnp.concatenate([params["wq"], params["wk"], params["wv"]], axis=0)  # [co, C]
    b_qkv = jnp.concatenate([params["bq"], params["bk"], params["bv"]], axis=0)  # [co, 1]

    if _single_tensorcore_chip():
        bb, grid = bs, (1,)        # v5e/v6e: one step, both images unrolled in-kernel
    else:
        bb, grid = 1, (bs,)        # v7x: one image per TensorCore via the parallel grid

    # Structural VMEM guard: the full [N, N] attention map is materialized per grid
    # step (256 KiB at N=256) and grows quadratically (64 MiB at N=4096 > v7x VMEM).
    # TODO(synk): add a query-row grid axis / flash-style path before scaling spatial size.
    assert bb * n * n * 4 <= 16 * 1024 * 1024, "attention block too large for VMEM; tile query rows"

    flops = bs * (2 * co * c * n + 2 * n * n * (cq + c) + 5 * n * n)
    bytes_accessed = 4 * (2 * bs * c * n + bs * n * n + co * c + co + 1)

    out_flat, att = pl.pallas_call(
        self_attention_kernel,
        out_shape=(jax.ShapeDtypeStruct((bs, c, n), jnp.float32),
                   jax.ShapeDtypeStruct((bs, n, n), jnp.float32)),
        grid=grid,
        in_specs=[
            pl.BlockSpec(memory_space=pltpu.MemorySpace.SMEM),       # gamma (scalar path)
            pl.BlockSpec((bb, c, n), lambda b: (b, 0, 0)),           # x
            pl.BlockSpec((co, c), lambda b: (0, 0)),                 # stacked W_qkv
            pl.BlockSpec((co, 1), lambda b: (0, 0)),                 # stacked b_qkv
        ],
        out_specs=(
            pl.BlockSpec((bb, c, n), lambda b: (b, 0, 0)),           # out features (lane-dense)
            pl.BlockSpec((bb, n, n), lambda b: (b, 0, 0)),           # attention map (lane-dense)
        ),
        compiler_params=pltpu.CompilerParams(
            dimension_semantics=("parallel",),
            vmem_limit_bytes=32 * 1024 * 1024),
        cost_estimate=pl.CostEstimate(flops=flops,
                                      transcendentals=bs * (n * n + n),
                                      bytes_accessed=bytes_accessed),
    )(params["gamma"], x_flat, w_qkv, b_qkv)

    return out_flat.reshape(bs, c, w, h), att


# --------------------------- pure-JAX reference ------------------------------
def self_attention_ref(x, params):
    bs, c, w, h = x.shape
    n = w * h
    xf = x.reshape(bs, c, n)
    hi = jax.lax.Precision.HIGHEST
    q = jnp.einsum("oc,bcn->bon", params["wq"], xf, precision=hi) + params["bq"][None]
    k = jnp.einsum("oc,bcn->bon", params["wk"], xf, precision=hi) + params["bk"][None]
    v = jnp.einsum("oc,bcn->bon", params["wv"], xf, precision=hi) + params["bv"][None]
    energy = jnp.einsum("bci,bcj->bij", q, k, precision=hi)
    att = jax.nn.softmax(energy, axis=-1)
    out = jnp.einsum("bcj,bij->bci", v, att, precision=hi)
    out = params["gamma"][0] * out + xf
    return out.reshape(bs, c, w, h), att


# ------------------------------ parameters -----------------------------------
def init_params(key):
    ks = jax.random.split(key, 6)
    scale = 1.0 / jnp.sqrt(jnp.float32(C))
    return {
        # torch Conv2d(1x1) weight [out, in, 1, 1] stored as [out, in]
        "wq": jax.random.normal(ks[0], (CQ, C), jnp.float32) * scale,
        "bq": jax.random.normal(ks[1], (CQ, 1), jnp.float32) * 0.1,
        "wk": jax.random.normal(ks[2], (CQ, C), jnp.float32) * scale,
        "bk": jax.random.normal(ks[3], (CQ, 1), jnp.float32) * 0.1,
        "wv": jax.random.normal(ks[4], (C, C), jnp.float32) * scale,
        "bv": jax.random.normal(ks[5], (C, 1), jnp.float32) * 0.1,
        # PyTorch initializes gamma to zeros (residual-only); use a nonzero value so
        # the attention branch is actually exercised by the numeric check below.
        "gamma": jnp.full((1,), 0.25, jnp.float32),
    }


if __name__ == "__main__":
    key = jax.random.PRNGKey(0)
    k_p, k_x = jax.random.split(key)
    params = init_params(k_p)
    x = jax.random.normal(k_x, (B, C, W, H), jnp.float32)

    out, att = self_attention_forward(x, params)
    out, att = jax.block_until_ready((out, att))

    assert out.shape == (B, C, W, H), out.shape
    assert att.shape == (B, N, N), att.shape
    assert bool(jnp.all(jnp.isfinite(out))) and bool(jnp.all(jnp.isfinite(att)))

    out_ref, att_ref = self_attention_ref(x, params)
    # Tolerances account for bf16 MXU operands + approx EUP reciprocal in the softmax.
    assert bool(jnp.allclose(att, att_ref, atol=2e-2, rtol=2e-2))
    assert bool(jnp.allclose(out, out_ref, atol=2e-2, rtol=2e-2))
    print("KERNEL_OK")
</pallas_src>

<mosaic_0001>
module attributes {stable_mosaic.version = 11 : i64} {
  func.func @self_attention_kernel(%arg0: i32, %arg1: memref<1xf32, #tpu.memory_space<smem>>, %arg2: memref<1x64x256xf32, #tpu.memory_space<vmem>>, %arg3: memref<80x64xf32, #tpu.memory_space<vmem>>, %arg4: memref<80x1xf32, #tpu.memory_space<vmem>>, %arg5: memref<1x64x256xf32, #tpu.memory_space<vmem>>, %arg6: memref<1x256x256xf32, #tpu.memory_space<vmem>>) attributes {dimension_semantics = [#tpu.dimension_semantics<parallel>], iteration_bounds = array<i64: 2>, scalar_prefetch = 0 : i64, scratch_operands = 0 : i64, tpu.core_type = #tpu.core_type<tc>, window_params = [{transform_indices = @transform_0, window_bounds = array<i64: 1>}, {transform_indices = @transform_1, window_bounds = array<i64: 1, 64, 256>}, {pipeline_mode = #tpu.pipeline_mode<synchronous>, transform_indices = @transform_2, window_bounds = array<i64: 80, 64>}, {pipeline_mode = #tpu.pipeline_mode<synchronous>, transform_indices = @transform_3, window_bounds = array<i64: 80, 1>}, {transform_indices = @transform_4, window_bounds = array<i64: 1, 64, 256>}, {transform_indices = @transform_5, window_bounds = array<i64: 1, 256, 256>}]} {
    %c0 = arith.constant 0 : index
    %0 = memref.load %arg1[%c0] : memref<1xf32, #tpu.memory_space<smem>>
    %c0_0 = arith.constant 0 : index
    %c0_1 = arith.constant 0 : index
    %1 = vector.load %arg3[%c0_0, %c0_1] : memref<80x64xf32, #tpu.memory_space<vmem>>, vector<80x64xf32>
    %2 = arith.truncf %1 : vector<80x64xf32> to vector<80x64xbf16>
    %c0_2 = arith.constant 0 : index
    %c0_3 = arith.constant 0 : index
    %3 = vector.load %arg4[%c0_2, %c0_3] : memref<80x1xf32, #tpu.memory_space<vmem>>, vector<80x1xf32>
    %c0_4 = arith.constant 0 : index
    %c0_5 = arith.constant 0 : index
    %c0_6 = arith.constant 0 : index
    %4 = vector.load %arg2[%c0_4, %c0_5, %c0_6] : memref<1x64x256xf32, #tpu.memory_space<vmem>>, vector<1x64x256xf32>
    %5 = vector.shape_cast %4 : vector<1x64x256xf32> to vector<64x256xf32>
    %6 = arith.truncf %5 : vector<64x256xf32> to vector<64x256xbf16>
    %cst = arith.constant dense<0.000000e+00> : vector<80x256xf32>
    %7 = tpu.matmul %2, %6, %cst {dimension_numbers = #tpu.dot_dimension_numbers<[1], [0], [0], [1], [0, 0, 1, 1], [], []>} : vector<80x64xbf16>, vector<64x256xbf16>, vector<80x256xf32> -> vector<80x256xf32>
    %8 = vector.broadcast %3 : vector<80x1xf32> to vector<80x256xf32>
    %9 = arith.addf %7, %8 : vector<80x256xf32>
    %10 = vector.extract_strided_slice %9 {offsets = [0, 0], sizes = [8, 256], strides = [1, 1]} : vector<80x256xf32> to vector<8x256xf32>
    %11 = arith.truncf %10 : vector<8x256xf32> to vector<8x256xbf16>
    %12 = vector.extract_strided_slice %9 {offsets = [8, 0], sizes = [8, 256], strides = [1, 1]} : vector<80x256xf32> to vector<8x256xf32>
    %13 = arith.truncf %12 : vector<8x256xf32> to vector<8x256xbf16>
    %14 = vector.extract_strided_slice %9 {offsets = [16, 0], sizes = [64, 256], strides = [1, 1]} : vector<80x256xf32> to vector<64x256xf32>
    %cst_7 = arith.constant dense<0.000000e+00> : vector<256x256xf32>
    %15 = tpu.matmul %11, %13, %cst_7 {dimension_numbers = #tpu.dot_dimension_numbers<[0], [0], [1], [1], [0, 1, 1, 1], [], []>} : vector<8x256xbf16>, vector<8x256xbf16>, vector<256x256xf32> -> vector<256x256xf32>
    %cst_8 = arith.constant dense<0xFF800000> : vector<256xf32>
    %16 = vector.multi_reduction <maximumf>, %15, %cst_8 [1] : vector<256x256xf32> to vector<256xf32>
    %17 = vector.shape_cast %16 : vector<256xf32> to vector<256x1xf32>
    %18 = vector.broadcast %17 : vector<256x1xf32> to vector<256x256xf32>
    %19 = arith.subf %15, %18 : vector<256x256xf32>
    %20 = math.exp %19 : vector<256x256xf32>
    %cst_9 = arith.constant dense<0.000000e+00> : vector<256xf32>
    %21 = vector.multi_reduction <add>, %20, %cst_9 [1] : vector<256x256xf32> to vector<256xf32>
    %22 = vector.shape_cast %21 : vector<256xf32> to vector<256x1xf32>
    %23 = tpu.reciprocal %22 {approx = true} : vector<256x1xf32> -> vector<256x1xf32>
    %24 = vector.broadcast %23 : vector<256x1xf32> to vector<256x256xf32>
    %25 = arith.mulf %20, %24 : vector<256x256xf32>
    %c0_10 = arith.constant 0 : index
    %c0_11 = arith.constant 0 : index
    %c0_12 = arith.constant 0 : index
    %26 = vector.load %arg6[%c0_10, %c0_11, %c0_12] : memref<1x256x256xf32, #tpu.memory_space<vmem>>, vector<1x256x256xf32>
    %27 = vector.shape_cast %26 : vector<1x256x256xf32> to vector<256x256xf32>
    %28 = vector.shape_cast %25 : vector<256x256xf32> to vector<1x256x256xf32>
    tpu.vector_store %arg6[%c0_10, %c0_11, %c0_12], %28 {strides = array<i32>} : memref<1x256x256xf32, #tpu.memory_space<vmem>>, vector<1x256x256xf32>,
    %29 = tpu.transpose %14, [1, 0] : vector<64x256xf32> -> vector<256x64xf32>
    %30 = arith.truncf %29 : vector<256x64xf32> to vector<256x64xbf16>
    %c0_13 = arith.constant 0 : index
    %c0_14 = arith.constant 0 : index
    %c0_15 = arith.constant 0 : index
    %31 = vector.load %arg6[%c0_13, %c0_14, %c0_15] : memref<1x256x256xf32, #tpu.memory_space<vmem>>, vector<1x256x256xf32>
    %32 = vector.shape_cast %31 : vector<1x256x256xf32> to vector<256x256xf32>
    %33 = arith.truncf %32 : vector<256x256xf32> to vector<256x256xbf16>
    %cst_16 = arith.constant dense<0.000000e+00> : vector<256x64xf32>
    %34 = tpu.matmul %33, %30, %cst_16 {dimension_numbers = #tpu.dot_dimension_numbers<[1], [0], [0], [1], [0, 0, 1, 1], [], []>} : vector<256x256xbf16>, vector<256x64xbf16>, vector<256x64xf32> -> vector<256x64xf32>
    %35 = tpu.transpose %34, [1, 0] : vector<256x64xf32> -> vector<64x256xf32>
    %36 = vector.broadcast %0 : f32 to vector<64x256xf32>
    %37 = arith.mulf %36, %35 : vector<64x256xf32>
    %38 = arith.addf %37, %5 : vector<64x256xf32>
    %c0_17 = arith.constant 0 : index
    %c0_18 = arith.constant 0 : index
    %c0_19 = arith.constant 0 : index
    %39 = vector.load %arg5[%c0_17, %c0_18, %c0_19] : memref<1x64x256xf32, #tpu.memory_space<vmem>>, vector<1x64x256xf32>
    %40 = vector.shape_cast %39 : vector<1x64x256xf32> to vector<64x256xf32>
    %41 = vector.shape_cast %38 : vector<64x256xf32> to vector<1x64x256xf32>
    tpu.vector_store %arg5[%c0_17, %c0_18, %c0_19], %41 {strides = array<i32>} : memref<1x64x256xf32, #tpu.memory_space<vmem>>, vector<1x64x256xf32>,
    return
  }
  func.func @transform_0(%arg0: i32) -> i32 {
    %c0_i32 = arith.constant 0 : i32
    %c0_i32_0 = arith.constant 0 : i32
    return %c0_i32 : i32
  }
  func.func @transform_1(%arg0: i32) -> (i32, i32, i32) {
    %c0_i32 = arith.constant 0 : i32
    %c0_i32_0 = arith.constant 0 : i32
    %c0_i32_1 = arith.constant 0 : i32
    return %arg0, %c0_i32, %c0_i32_0 : i32, i32, i32
  }
  func.func @transform_2(%arg0: i32) -> (i32, i32) {
    %c0_i32 = arith.constant 0 : i32
    %c0_i32_0 = arith.constant 0 : i32
    %c0_i32_1 = arith.constant 0 : i32
    return %c0_i32, %c0_i32_0 : i32, i32
  }
  func.func @transform_3(%arg0: i32) -> (i32, i32) {
    %c0_i32 = arith.constant 0 : i32
    %c0_i32_0 = arith.constant 0 : i32
    %c0_i32_1 = arith.constant 0 : i32
    return %c0_i32, %c0_i32_0 : i32, i32
  }
  func.func @transform_4(%arg0: i32) -> (i32, i32, i32) {
    %c0_i32 = arith.constant 0 : i32
    %c0_i32_0 = arith.constant 0 : i32
    %c0_i32_1 = arith.constant 0 : i32
    return %arg0, %c0_i32, %c0_i32_0 : i32, i32, i32
  }
  func.func @transform_5(%arg0: i32) -> (i32, i32, i32) {
    %c0_i32 = arith.constant 0 : i32
    %c0_i32_0 = arith.constant 0 : i32
    %c0_i32_1 = arith.constant 0 : i32
    return %arg0, %c0_i32, %c0_i32_0 : i32, i32, i32
  }
}

</mosaic_0001>

<llo_original>
// kernel: tpu_custom_call.1
$region0: #{tpu_custom_call.1}
  #allocation0 [shape = 'u32[]', space=smem, size = 0x4, offset = 0x4, fixed_abs, tag = 'smem constant byte address 0x4 - core index']
  #allocation1 [shape = 'u32[144,128]{1,0:T(1,128)}', space=vmem, size = 0x12000, scoped, tag = 'internal scratch']
  #allocation2 [shape = 'f32[1]{0:T(128)S(6)}', space=smem, size = 0x200, scoped, tag = 'scoped memory for tpu_custom_call.1']
  %s0 = inlined_call_operand.<no memory space> [shape: f32[1], index: 0, kind: input, shape index: {}]
  %s1 = inlined_call_operand.hbm [shape: f32[2,64,256], index: 1, kind: input, shape index: {}]
  %s2 = inlined_call_operand.vmem [shape: f32[80,64], index: 2, kind: input, shape index: {}]
  %s3 = inlined_call_operand.vmem [shape: f32[80,1], index: 3, kind: input, shape index: {}]
  %s4 = inlined_call_operand.hbm [shape: f32[2,64,256], index: 4, kind: output, shape index: {0}]
  %s5 = inlined_call_operand.hbm [shape: f32[2,256,256], index: 5, kind: output, shape index: {1}]
  %6 = xla_tuple %s4, %s5
  %s7 = sld [smem:[#allocation0]]
  $region61: #{tpu_custom_call.1} parent=0
    _
  %s9 = ssub.s32 1, %s7
  %s10 = scalar_select 0, %s9, %s7
  %11 = sst [smem:[#allocation2]] %s0
  $region1: #{tpu_custom_call.1} parent=0
    #allocation3 [shape = 'u8[131072]{0}', space=vmem, size = 0x20000, scoped, tag = 'input window, operand 1']
    #allocation4 [shape = 's32[2]{0}', space=sflag, size = 0x8, scoped, tag = 'scoped memory for tpu_custom_call.1']
    #allocation5 [shape = 's32[2]{0}', space=sflag, size = 0x8, scoped, tag = 'scoped memory for tpu_custom_call.1']
    #allocation6 [shape = 'u8[131072]{0}', space=vmem, size = 0x20000, scoped, tag = 'output window, operand 0']
    #allocation7 [shape = 'u8[524288]{0}', space=vmem, size = 0x80000, scoped, tag = 'output window, operand 1']
    #allocation8 [shape = 's32[2]{0}', space=sflag, size = 0x8, scoped, tag = 'scoped memory for tpu_custom_call.1']
    %12 = vsyncpa [#allocation4], 0
    %s13 = scalar_lea.sflag [#allocation4], 1
    %14 = vsyncpa %s13, 0
    %15 = vsyncpa [#allocation5], 0
    %s16 = scalar_lea.sflag [#allocation5], 1
    %17 = vsyncpa %s16, 0
    %18 = vsyncpa [#allocation8], 0
    %s19 = scalar_lea.sflag [#allocation8], 1
    %20 = vsyncpa %s19, 0
    loop: start=0, step=1, limit=4
    $region2: #{tpu_custom_call.1} parent=1 // loop_pre_header
      _
    $region3: #{tpu_custom_call.1} parent=1 // loop_header
      %s22 = sphi 0, %s26
      %p23 = scmp.ge.s32.totalorder %s22, 4
      %s30 = sphi 0, %s30
      %s32 = sphi 0, %s30
      %s33 = sphi 0, %s32
      %s47 = sphi 0, %s33
      %s53 = sphi 0, %s55
      %s56 = sphi 0, %s53
      %s57 = sphi 0, %s56
      %s73 = sphi 0, %s57
      %s77 = sphi 0, %s77
      %s79 = sphi 0, %s77
      %s80 = sphi 0, %s79
      %s94 = sphi 0, %s80
      %s98 = sphi 0, %s98
      %s100 = sphi 0, %s98
      %s101 = sphi 0, %s100
      %s115 = sphi 0, %s101
      %s121 = sphi 0, %s123
      %s124 = sphi 0, %s121
      %s125 = sphi 0, %s124
      %s141 = sphi 0, %s125
      %s147 = sphi 0, %s149
      %s150 = sphi 0, %s147
      %s151 = sphi 0, %s150
      %s167 = sphi 0, %s151
    $region4: #{tpu_custom_call.1} parent=1 // loop_header_branch
      %25 = sbr.rel (%p23) target = $region8
    $region5: #{tpu_custom_call.1} parent=1 // loop_body
      %s27 = ssub.s32 %s22, 1
      %s28 = ssub.s32 %s22, 2
      %s29 = sadd.s32 %s22, 1
      %s31 = sadd.s32 %s30, 1
      %p34 = scmp.eq.s32.totalorder %s22, 1
      %p35 = scmp.ne.s32.totalorder %s30, %s32
      %p36 = scmp.eq.s32.totalorder %s22, 0
      %p37 = por %p35, %p36
      %p38 = scmp.ne.s32.totalorder %s30, %s32
      %p39 = scmp.eq.s32.totalorder %s27, 1
      %p40 = por %p38, %p39
      %p41 = scmp.ne.s32.totalorder %s32, %s33
      %p42 = scmp.eq.s32.totalorder %s27, 0
      %p43 = por %p41, %p42
      %p44 = scmp.ne.s32.totalorder %s32, %s33
      %p45 = scmp.eq.s32.totalorder %s28, 1
      %p46 = por %p44, %p45
      %p48 = scmp.ne.s32.totalorder %s33, %s47
      %p49 = scmp.eq.s32.totalorder %s28, 0
      %p50 = por %p48, %p49
      %s51 = ssub.s32 %s22, %s29
      %p52 = scmp.eq.s32.totalorder %s51, 0
      %s54 = sadd.s32 %s53, 1
      %s55 = scalar_select %p52, %s53, %s54
      %p58 = pneg %p52
      %p59 = scmp.eq.s32.totalorder %s22, 1
      %p60 = por %p58, %p59
      %p61 = scmp.ne.s32.totalorder %s53, %s56
      %p62 = scmp.eq.s32.totalorder %s22, 0
      %p63 = por %p61, %p62
      %p64 = scmp.ne.s32.totalorder %s53, %s56
      %p65 = scmp.eq.s32.totalorder %s27, 1
      %p66 = por %p64, %p65
      %p67 = scmp.ne.s32.totalorder %s56, %s57
      %p68 = scmp.eq.s32.totalorder %s27, 0
      %p69 = por %p67, %p68
      %p70 = scmp.ne.s32.totalorder %s56, %s57
      %p71 = scmp.eq.s32.totalorder %s28, 1
      %p72 = por %p70, %p71
      %p74 = scmp.ne.s32.totalorder %s57, %s73
      %p75 = scmp.eq.s32.totalorder %s28, 0
      %p76 = por %p74, %p75
      %s78 = sadd.s32 %s77, 1
      %p81 = scmp.eq.s32.totalorder %s22, 1
      %p82 = scmp.ne.s32.totalorder %s77, %s79
      %p83 = scmp.eq.s32.totalorder %s22, 0
      %p84 = por %p82, %p83
      %p85 = scmp.ne.s32.totalorder %s77, %s79
      %p86 = scmp.eq.s32.totalorder %s27, 1
      %p87 = por %p85, %p86
      %p88 = scmp.ne.s32.totalorder %s79, %s80
      %p89 = scmp.eq.s32.totalorder %s27, 0
      %p90 = por %p88, %p89
      %p91 = scmp.ne.s32.totalorder %s79, %s80
      %p92 = scmp.eq.s32.totalorder %s28, 1
      %p93 = por %p91, %p92
      %p95 = scmp.ne.s32.totalorder %s80, %s94
      %p96 = scmp.eq.s32.totalorder %s28, 0
      %p97 = por %p95, %p96
      %s99 = sadd.s32 %s98, 1
      %p102 = scmp.eq.s32.totalorder %s22, 1
      %p103 = scmp.ne.s32.totalorder %s98, %s100
      %p104 = scmp.eq.s32.totalorder %s22, 0
      %p105 = por %p103, %p104
      %p106 = scmp.ne.s32.totalorder %s98, %s100
      %p107 = scmp.eq.s32.totalorder %s27, 1
      %p108 = por %p106, %p107
      %p109 = scmp.ne.s32.totalorder %s100, %s101
      %p110 = scmp.eq.s32.totalorder %s27, 0
      %p111 = por %p109, %p110
      %p112 = scmp.ne.s32.totalorder %s100, %s101
      %p113 = scmp.eq.s32.totalorder %s28, 1
      %p114 = por %p112, %p113
      %p116 = scmp.ne.s32.totalorder %s101, %s115
      %p117 = scmp.eq.s32.totalorder %s28, 0
      %p118 = por %p116, %p117
      %s119 = ssub.s32 %s22, %s29
      %p120 = scmp.eq.s32.totalorder %s119, 0
      %s122 = sadd.s32 %s121, 1
      %s123 = scalar_select %p120, %s121, %s122
      %p126 = pneg %p120
      %p127 = scmp.eq.s32.totalorder %s22, 1
      %p128 = por %p126, %p127
      %p129 = scmp.ne.s32.totalorder %s121, %s124
      %p130 = scmp.eq.s32.totalorder %s22, 0
      %p131 = por %p129, %p130
      %p132 = scmp.ne.s32.totalorder %s121, %s124
      %p133 = scmp.eq.s32.totalorder %s27, 1
      %p134 = por %p132, %p133
      %p135 = scmp.ne.s32.totalorder %s124, %s125
      %p136 = scmp.eq.s32.totalorder %s27, 0
      %p137 = por %p135, %p136
      %p138 = scmp.ne.s32.totalorder %s124, %s125
      %p139 = scmp.eq.s32.totalorder %s28, 1
      %p140 = por %p138, %p139
      %p142 = scmp.ne.s32.totalorder %s125, %s141
      %p143 = scmp.eq.s32.totalorder %s28, 0
      %p144 = por %p142, %p143
      %s145 = ssub.s32 %s22, %s29
      %p146 = scmp.eq.s32.totalorder %s145, 0
      %s148 = sadd.s32 %s147, 1
      %s149 = scalar_select %p146, %s147, %s148
      %p152 = pneg %p146
      %p153 = scmp.eq.s32.totalorder %s22, 1
      %p154 = por %p152, %p153
      %p155 = scmp.ne.s32.totalorder %s147, %s150
      %p156 = scmp.eq.s32.totalorder %s22, 0
      %p157 = por %p155, %p156
      %p158 = scmp.ne.s32.totalorder %s147, %s150
      %p159 = scmp.eq.s32.totalorder %s27, 1
      %p160 = por %p158, %p159
      %p161 = scmp.ne.s32.totalorder %s150, %s151
      %p162 = scmp.eq.s32.totalorder %s27, 0
      %p163 = por %p161, %p162
      %p164 = scmp.ne.s32.totalorder %s150, %s151
      %p165 = scmp.eq.s32.totalorder %s28, 1
      %p166 = por %p164, %p165
      %p168 = scmp.ne.s32.totalorder %s151, %s167
      %p169 = scmp.eq.s32.totalorder %s28, 0
      %p170 = por %p168, %p169
      %p171 = scmp.le.s32.totalorder 1, %s22
      %p172 = scmp.lt.s32.totalorder %s22, 3
      %p173 = pnand %p171, %p172
      %p174 = pneg %p173
      // Predicated region
      $region9: #{tpu_custom_call.1} parent=5 // pred_check
        _
      $region10: #{tpu_custom_call.1} parent=5 // pred_check_branch
        %176 = sbr.rel (%p173) target = $region12
      $region11: #{tpu_custom_call.1} parent=5 // pred_region
        %s177 = ssub.s32 %s22, 1
        // Predicated region
        $region13: #{tpu_custom_call.1} parent=11 // pred_check
          %p178 = pneg %p43
        $region14: #{tpu_custom_call.1} parent=11 // pred_check_branch
          %180 = sbr.rel (%p178) target = $region16
        $region15: #{tpu_custom_call.1} parent=11 // pred_region
          _
        $region16: #{tpu_custom_call.1} parent=11 // pred_fallthru
          _
        // Predicated region
        $region17: #{tpu_custom_call.1} parent=11 // pred_check
          %p181 = pneg %p90
        $region18: #{tpu_custom_call.1} parent=11 // pred_check_branch
          %183 = sbr.rel (%p181) target = $region20
        $region19: #{tpu_custom_call.1} parent=11 // pred_region
          _
        $region20: #{tpu_custom_call.1} parent=11 // pred_fallthru
          _
        // Predicated region
        $region21: #{tpu_custom_call.1} parent=11 // pred_check
          %p184 = pneg %p111
        $region22: #{tpu_custom_call.1} parent=11 // pred_check_branch
          %186 = sbr.rel (%p184) target = $region24
        $region23: #{tpu_custom_call.1} parent=11 // pred_region
          _
        $region24: #{tpu_custom_call.1} parent=11 // pred_fallthru
          _
      $region12: #{tpu_custom_call.1} parent=5 // pred_fallthru
        _
      %p187 = scmp.lt.s32.totalorder %s22, 2
      // Predicated region
      $region25: #{tpu_custom_call.1} parent=5 // pred_check
        %p188 = pneg %p187
      $region26: #{tpu_custom_call.1} parent=5 // pred_check_branch
        %190 = sbr.rel (%p188) target = $region28
      $region27: #{tpu_custom_call.1} parent=5 // pred_region
        // Predicated region
        $region29: #{tpu_custom_call.1} parent=27 // pred_check
          %p191 = pneg %p63
        $region30: #{tpu_custom_call.1} parent=27 // pred_check_branch
          %193 = sbr.rel (%p191) target = $region32
        $region31: #{tpu_custom_call.1} parent=27 // pred_region
          %s194 = sand.u32 %s53, 1
          %s195 = scalar_lea.sflag [#allocation4], %s194
          %s196 = sand.u32 %s53, 1
          %s197 = smul.addr %s196, 128
          %s198 = scalar_lea.vmem [#allocation3], %s197
          %s200 = ssub.s32 2048, 2048
          %201 = vsyncadd %s195, %s200
          %s202 = smul.addr %s22, 16
          %s203 = smul.addr %s202, 128
          %s204 = scalar_lea.hbm %s1, %s203
          %s205 = sshll.u32 %s198, 4
          %s206 = int_to_ptr.vmem [resolvable:$true] %s205
          %211 = dma.hbm_to_vmem [thread:$0]  %s204, 2048, %s206, %s195, 256, 256, 16
        $region32: #{tpu_custom_call.1} parent=27 // pred_fallthru
          _
      $region28: #{tpu_custom_call.1} parent=5 // pred_fallthru
        _
      %p212 = scmp.le.s32.totalorder 1, %s22
      %p213 = scmp.lt.s32.totalorder %s22, 3
      %p214 = pnand %p212, %p213
      %p215 = pneg %p214
      // Predicated region
      $region33: #{tpu_custom_call.1} parent=5 // pred_check
        _
      $region34: #{tpu_custom_call.1} parent=5 // pred_check_branch
        %217 = sbr.rel (%p214) target = $region36
      $region35: #{tpu_custom_call.1} parent=5 // pred_region
        %s218 = ssub.s32 %s22, 1
        %s219 = sand.u32 %s56, 1
        %s220 = scalar_lea.sflag [#allocation4], %s219
        %s221 = sand.u32 %s56, 1
        %s222 = smul.addr %s221, 128
        %s223 = scalar_lea.vmem [#allocation3], %s222
        // Predicated region
        $region37: #{tpu_custom_call.1} parent=35 // pred_check
          %p224 = pneg %p69
        $region38: #{tpu_custom_call.1} parent=35 // pred_check_branch
          %226 = sbr.rel (%p224) target = $region40
        $region39: #{tpu_custom_call.1} parent=35 // pred_region
          %227 = dma.done %s220, 2048
        $region40: #{tpu_custom_call.1} parent=35 // pred_fallthru
          _
        %p228 = pneg %p43
        %p229 = pneg %p40
        %s230 = sand.u32 %s56, 1
        %s231 = scalar_lea.sflag [#allocation4], %s230
        %s232 = sand.u32 %s56, 1
        %s233 = smul.addr %s232, 128
        %s234 = scalar_lea.vmem [#allocation3], %s233
        %p235 = pneg %p69
        %p236 = pneg %p66
        %p237 = pneg %p90
        %p238 = pneg %p87
        %p239 = pneg %p111
        %p240 = pneg %p108
        %p241 = pneg %p137
        %p242 = pneg %p134
        %s243 = sand.u32 %s124, 1
        %s244 = scalar_lea.sflag [#allocation5], %s243
        %s245 = sand.u32 %s124, 1
        %s246 = smul.addr %s245, 128
        %s247 = scalar_lea.vmem [#allocation6], %s246
        %p248 = pneg %p163
        %p249 = pneg %p160
        %s250 = sand.u32 %s150, 1
        %s251 = scalar_lea.sflag [#allocation8], %s250
        %s252 = sand.u32 %s150, 1
        %s253 = smul.addr %s252, 512
        %s254 = scalar_lea.vmem [#allocation7], %s253
        %s256 = sld [smem:[#allocation2]]
        %v257 = vld [vmem:[%s2] sm:$0xff]
        %v258 = vld [vmem:[%s2 + $0x8] sm:$0xff]
        %v259 = vld [vmem:[%s2 + $0x10] sm:$0xff]
        %v260 = vld [vmem:[%s2 + $0x18] sm:$0xff]
        %v261 = vld [vmem:[%s2 + $0x20] sm:$0xff]
        %v262 = vld [vmem:[%s2 + $0x28] sm:$0xff]
        %v263 = vld [vmem:[%s2 + $0x30] sm:$0xff]
        %v264 = vld [vmem:[%s2 + $0x38] sm:$0xff]
        %v265 = vld [vmem:[%s2 + $0x40] sm:$0xff]
        %v266 = vld [vmem:[%s2 + $0x48] sm:$0xff]
        %v267 = vpack.c.bf16 %v258, %v257
        %v268 = vpack.c.bf16 %v260, %v259
        %v269 = vpack.c.bf16 %v262, %v261
        %v270 = vpack.c.bf16 %v264, %v263
        %v271 = vpack.c.bf16 %v266, %v265
        %v272 = vld [vmem:[%s3] sm:$0xff]
        %v273 = vld [vmem:[%s3 + $0x8] sm:$0xff]
        %v274 = vld [vmem:[%s3 + $0x10] sm:$0xff]
        %v275 = vld [vmem:[%s3 + $0x18] sm:$0xff]
        %v276 = vld [vmem:[%s3 + $0x20] sm:$0xff]
        %v277 = vld [vmem:[%s3 + $0x28] sm:$0xff]
        %v278 = vld [vmem:[%s3 + $0x30] sm:$0xff]
        %v279 = vld [vmem:[%s3 + $0x38] sm:$0xff]
        %v280 = vld [vmem:[%s3 + $0x40] sm:$0xff]
        %v281 = vld [vmem:[%s3 + $0x48] sm:$0xff]
        %v282 = vld [vmem:[%s223] sm:$0xff]
        %v283 = vld [vmem:[%s223 + $0x8] sm:$0xff]
        %v284 = vld [vmem:[%s223 + $0x10] sm:$0xff]
        %v285 = vld [vmem:[%s223 + $0x18] sm:$0xff]
        %v286 = vld [vmem:[%s223 + $0x20] sm:$0xff]
        %v287 = vld [vmem:[%s223 + $0x28] sm:$0xff]
        %v288 = vld [vmem:[%s223 + $0x30] sm:$0xff]
        %v289 = vld [vmem:[%s223 + $0x38] sm:$0xff]
        %v290 = vld [vmem:[%s223 + $0x40] sm:$0xff]
        %v291 = vld [vmem:[%s223 + $0x48] sm:$0xff]
        %v292 = vld [vmem:[%s223 + $0x50] sm:$0xff]
        %v293 = vld [vmem:[%s223 + $0x58] sm:$0xff]
        %v294 = vld [vmem:[%s223 + $0x60] sm:$0xff]
        %v295 = vld [vmem:[%s223 + $0x68] sm:$0xff]
        %v296 = vld [vmem:[%s223 + $0x70] sm:$0xff]
        %v297 = vld [vmem:[%s223 + $0x78] sm:$0xff]
        %v298 = vpack.c.bf16 %v284, %v282
        %v299 = vpack.c.bf16 %v285, %v283
        %v300 = vpack.c.bf16 %v288, %v286
        %v301 = vpack.c.bf16 %v289, %v287
        %v302 = vpack.c.bf16 %v292, %v290
        %v303 = vpack.c.bf16 %v293, %v291
        %v304 = vpack.c.bf16 %v296, %v294
        %v305 = vpack.c.bf16 %v297, %v295
        %307 = vset.pattern.permute.xlu0 0
        %308 = vperm.xlu0 %307, %v272
        %v309 = vpop.permute.xlu0 %308
        %312 = vset.pattern.permute.xlu0 0
        %313 = vperm.xlu0 %312, %v273
        %v314 = vpop.permute.xlu0 %313
        %317 = vset.pattern.permute.xlu0 0
        %318 = vperm.xlu0 %317, %v274
        %v319 = vpop.permute.xlu0 %318
        %322 = vset.pattern.permute.xlu0 0
        %323 = vperm.xlu0 %322, %v275
        %v324 = vpop.permute.xlu0 %323
        %327 = vset.pattern.permute.xlu0 0
        %328 = vperm.xlu0 %327, %v276
        %v329 = vpop.permute.xlu0 %328
        %332 = vset.pattern.permute.xlu0 0
        %333 = vperm.xlu0 %332, %v277
        %v334 = vpop.permute.xlu0 %333
        %337 = vset.pattern.permute.xlu0 0
        %338 = vperm.xlu0 %337, %v278
        %v339 = vpop.permute.xlu0 %338
        %342 = vset.pattern.permute.xlu0 0
        %343 = vperm.xlu0 %342, %v279
        %v344 = vpop.permute.xlu0 %343
        %347 = vset.pattern.permute.xlu0 0
        %348 = vperm.xlu0 %347, %v280
        %v349 = vpop.permute.xlu0 %348
        %352 = vset.pattern.permute.xlu0 0
        %353 = vperm.xlu0 %352, %v281
        %v354 = vpop.permute.xlu0 %353
        %vm356 = vcmask 523264
        %v358 = vsel %vm356, %v267, 0
        %v361 = vsel %vm356, %v268, 0
        %v364 = vsel %vm356, %v269, 0
        %v367 = vsel %vm356, %v270, 0
        %v370 = vsel %vm356, %v271, 0
        %372 = vmatprep.subr.bf16.mxu0 %v299
        %373 = vmatpush1.bf16.msra.mxu0 %v298
        %374 = vmatprep.subr.bf16.mxu0 %v301
        %375 = vmatpush1.bf16.msra.mxu0 %v300
        %376 = vmatprep.subr.bf16.mxu0 %v303
        %377 = vmatpush1.bf16.msra.mxu0 %v302
        %378 = vmatprep.subr.bf16.mxu0 %v305
        %379 = vmatpush1.bf16.msra.mxu0 %v304
        %380 = vmatprep.subr.bf16.mxu0 0
        %381 = vmatpush1.bf16.msra.mxu0 0
        %382 = vmatprep.subr.bf16.mxu0 0
        %383 = vmatpush1.bf16.msra.mxu0 0
        %384 = vmatprep.subr.bf16.mxu0 0
        %385 = vmatpush1.bf16.msra.mxu0 0
        %386 = vmatprep.subr.bf16.mxu0 0
        %387 = vmatpush1.bf16.msra.mxu0 0
        %388 = vmatprep.subr.bf16.mxu0 0
        %389 = vmatpush1.bf16.msra.mxu0 0
        %390 = vmatprep.subr.bf16.mxu0 0
        %391 = vmatpush1.bf16.msra.mxu0 0
        %392 = vmatprep.subr.bf16.mxu0 0
        %393 = vmatpush1.bf16.msra.mxu0 0
        %394 = vmatprep.subr.bf16.mxu0 0
        %395 = vmatpush1.bf16.msra.mxu0 0
        %396 = vmatprep.subr.bf16.mxu0 0
        %397 = vmatpush1.bf16.msra.mxu0 0
        %398 = vmatprep.subr.bf16.mxu0 0
        %399 = vmatpush1.bf16.msra.mxu0 0
        %400 = vmatprep.subr.bf16.mxu0 0
        %401 = vmatpush1.bf16.msra.mxu0 0
        %402 = vmatprep.subr.bf16.mxu0 0
        %403 = vmatpush1.bf16.msra.mxu0 0
        %404 = vmatprep.mubr.bf16.mxu0 0
        %405 = vmatmul.mubr.bf16.gmra.mrb[0].mxu0 %v358
        %v406 = vpop.f32.mrb[0].mxu0
        %v407 = vadd.f32 %v309, %v406
        %v408 = vpop.f32.mrb[0].mxu0
        %v409 = vadd.f32 %v309, %v408
        %v410 = vpop.f32.mrb[0].mxu0
        %v411 = vadd.f32 %v314, %v410
        %v412 = vpop.f32.mrb[0].mxu0
        %v413 = vadd.f32 %v314, %v412
        %414 = vmatprep.mubr.bf16.mxu0 0
        %415 = vmatmul.mubr.bf16.gmra.mrb[0].mxu0 %v361
        %v416 = vpop.f32.mrb[0].mxu0
        %v417 = vadd.f32 %v319, %v416
        %v418 = vpop.f32.mrb[0].mxu0
        %v419 = vadd.f32 %v319, %v418
        %v420 = vpop.f32.mrb[0].mxu0
        %v421 = vadd.f32 %v324, %v420
        %v422 = vpop.f32.mrb[0].mxu0
        %v423 = vadd.f32 %v324, %v422
        %424 = vmatprep.mubr.bf16.mxu0 0
        %425 = vmatmul.mubr.bf16.gmra.mrb[0].mxu0 %v364
        %v426 = vpop.f32.mrb[0].mxu0
        %v427 = vadd.f32 %v329, %v426
        %v428 = vpop.f32.mrb[0].mxu0
        %v429 = vadd.f32 %v329, %v428
        %v430 = vpop.f32.mrb[0].mxu0
        %v431 = vadd.f32 %v334, %v430
        %v432 = vpop.f32.mrb[0].mxu0
        %v433 = vadd.f32 %v334, %v432
        %434 = vmatprep.mubr.bf16.mxu0 0
        %435 = vmatmul.mubr.bf16.gmra.mrb[0].mxu0 %v367
        %v436 = vpop.f32.mrb[0].mxu0
        %v437 = vadd.f32 %v339, %v436
        %v438 = vpop.f32.mrb[0].mxu0
        %v439 = vadd.f32 %v339, %v438
        %v440 = vpop.f32.mrb[0].mxu0
        %v441 = vadd.f32 %v344, %v440
        %v442 = vpop.f32.mrb[0].mxu0
        %v443 = vadd.f32 %v344, %v442
        %444 = vmatprep.mubr.bf16.mxu0 0
        %445 = vmatmul.mubr.bf16.gmra.mrb[0].mxu0 %v370
        %v446 = vpop.f32.mrb[0].mxu0
        %v447 = vadd.f32 %v349, %v446
        %v448 = vpop.f32.mrb[0].mxu0
        %v449 = vadd.f32 %v349, %v448
        %v450 = vpop.f32.mrb[0].mxu0
        %v451 = vadd.f32 %v354, %v450
        %v452 = vpop.f32.mrb[0].mxu0
        %v453 = vadd.f32 %v354, %v452
        %454 = vdwg.mxu0
        %v455 = vpack.c.bf16 %v407, %v407
        %v456 = vpack.c.bf16 %v409, %v409
        %v457 = vpack.c.bf16 %v411, %v411
        %v458 = vpack.c.bf16 %v413, %v413
        %459 = vxpose.xlu0.c.b16.start [1/8] %v455, 128
        %460 = vxpose.xlu0.c.b16.cont [2/8] 0, 128
        %461 = vxpose.xlu0.c.b16.cont [3/8] 0, 128
        %462 = vxpose.xlu0.c.b16.cont [4/8] 0, 128
        %463 = vxpose.xlu0.c.b16.cont [5/8] 0, 128
        %464 = vxpose.xlu0.c.b16.cont [6/8] 0, 128
        %465 = vxpose.xlu0.c.b16.cont [7/8] 0, 128
        %466 = vxpose.xlu0.c.b16.end [8/8] 0, 128
        %v467 = vpop.trf.xlu0
        %v468 = vpop.trf.xlu0
        %v469 = vpop.trf.xlu0
        %v470 = vpop.trf.xlu0
        %v471 = vpop.trf.xlu0
        %v472 = vpop.trf.xlu0
        %v473 = vpop.trf.xlu0
        %v474 = vpop.trf.xlu0
        %475 = vxpose.xlu0.c.b16.start [1/8] %v456, 128
        %476 = vxpose.xlu0.c.b16.cont [2/8] 0, 128
        %477 = vxpose.xlu0.c.b16.cont [3/8] 0, 128
        %478 = vxpose.xlu0.c.b16.cont [4/8] 0, 128
        %479 = vxpose.xlu0.c.b16.cont [5/8] 0, 128
        %480 = vxpose.xlu0.c.b16.cont [6/8] 0, 128
        %481 = vxpose.xlu0.c.b16.cont [7/8] 0, 128
        %482 = vxpose.xlu0.c.b16.end [8/8] 0, 128
        %v483 = vpop.trf.xlu0
        %v484 = vpop.trf.xlu0
        %v485 = vpop.trf.xlu0
        %v486 = vpop.trf.xlu0
        %v487 = vpop.trf.xlu0
        %v488 = vpop.trf.xlu0
        %v489 = vpop.trf.xlu0
        %v490 = vpop.trf.xlu0
        %vm491 = vcmask 64512
        %v493 = vsel %vm491, %v467, 0
        %v496 = vsel %vm491, %v468, 0
        %v499 = vsel %vm491, %v469, 0
        %v502 = vsel %vm491, %v470, 0
        %v505 = vsel %vm491, %v471, 0
        %v508 = vsel %vm491, %v472, 0
        %v511 = vsel %vm491, %v473, 0
        %v514 = vsel %vm491, %v474, 0
        %v517 = vsel %vm491, %v483, 0
        %v520 = vsel %vm491, %v484, 0
        %v523 = vsel %vm491, %v485, 0
        %v526 = vsel %vm491, %v486, 0
        %v529 = vsel %vm491, %v487, 0
        %v532 = vsel %vm491, %v488, 0
        %v535 = vsel %vm491, %v489, 0
        %v538 = vsel %vm491, %v490, 0
        %vm540 = vcmask 1043456
        %v542 = vsel %vm540, %v457, 0
        %v545 = vsel %vm540, %v458, 0
        %547 = vmatprep.subr.bf16.mxu0 %v545
        %548 = vmatpush1.bf16.msra.mxu0 %v542
        %549 = vmatprep.subr.bf16.mxu0 0
        %550 = vmatpush1.bf16.msra.mxu0 0
        %551 = vmatprep.subr.bf16.mxu0 0
        %552 = vmatpush1.bf16.msra.mxu0 0
        %553 = vmatprep.subr.bf16.mxu0 0
        %554 = vmatpush1.bf16.msra.mxu0 0
        %555 = vmatprep.subr.bf16.mxu0 0
        %556 = vmatpush1.bf16.msra.mxu0 0
        %557 = vmatprep.subr.bf16.mxu0 0
        %558 = vmatpush1.bf16.msra.mxu0 0
        %559 = vmatprep.subr.bf16.mxu0 0
        %560 = vmatpush1.bf16.msra.mxu0 0
        %561 = vmatprep.subr.bf16.mxu0 0
        %562 = vmatpush1.bf16.msra.mxu0 0
        %563 = vmatprep.subr.bf16.mxu0 0
        %564 = vmatpush1.bf16.msra.mxu0 0
        %565 = vmatprep.subr.bf16.mxu0 0
        %566 = vmatpush1.bf16.msra.mxu0 0
        %567 = vmatprep.subr.bf16.mxu0 0
        %568 = vmatpush1.bf16.msra.mxu0 0
        %569 = vmatprep.subr.bf16.mxu0 0
        %570 = vmatpush1.bf16.msra.mxu0 0
        %571 = vmatprep.subr.bf16.mxu0 0
        %572 = vmatpush1.bf16.msra.mxu0 0
        %573 = vmatprep.subr.bf16.mxu0 0
        %574 = vmatpush1.bf16.msra.mxu0 0
        %575 = vmatprep.subr.bf16.mxu0 0
        %576 = vmatpush1.bf16.msra.mxu0 0
        %577 = vmatprep.subr.bf16.mxu0 0
        %578 = vmatpush1.bf16.msra.mxu0 0
        %579 = vmatprep.mubr.bf16.mxu0 0
        %580 = vmatmul.mubr.bf16.gmra.mrb[0].mxu0 %v493
        %v581 = vpop.f32.mrb[0].mxu0
        %v582 = vadd.f32 0.0, %v581
        %v583 = vpop.f32.mrb[0].mxu0
        %v584 = vadd.f32 0.0, %v583
        %v585 = vpop.f32.mrb[0].mxu0
        %v586 = vadd.f32 0.0, %v585
        %v587 = vpop.f32.mrb[0].mxu0
        %v588 = vadd.f32 0.0, %v587
        %589 = vmatprep.mubr.bf16.mxu0 0
        %590 = vmatmul.mubr.bf16.gmra.mrb[0].mxu0 %v496
        %v591 = vpop.f32.mrb[0].mxu0
        %v592 = vadd.f32 0.0, %v591
        %v593 = vpop.f32.mrb[0].mxu0
        %v594 = vadd.f32 0.0, %v593
        %v595 = vpop.f32.mrb[0].mxu0
        %v596 = vadd.f32 0.0, %v595
        %v597 = vpop.f32.mrb[0].mxu0
        %v598 = vadd.f32 0.0, %v597
        %599 = vmatprep.mubr.bf16.mxu0 0
        %600 = vmatmul.mubr.bf16.gmra.mrb[0].mxu0 %v499
        %v601 = vpop.f32.mrb[0].mxu0
        %v602 = vadd.f32 0.0, %v601
        %v603 = vpop.f32.mrb[0].mxu0
        %v604 = vadd.f32 0.0, %v603
        %v605 = vpop.f32.mrb[0].mxu0
        %v606 = vadd.f32 0.0, %v605
        %v607 = vpop.f32.mrb[0].mxu0
        %v608 = vadd.f32 0.0, %v607
        %609 = vmatprep.mubr.bf16.mxu0 0
        %610 = vmatmul.mubr.bf16.gmra.mrb[0].mxu0 %v502
        %v611 = vpop.f32.mrb[0].mxu0
        %v612 = vadd.f32 0.0, %v611
        %v613 = vpop.f32.mrb[0].mxu0
        %v614 = vadd.f32 0.0, %v613
        %v615 = vpop.f32.mrb[0].mxu0
        %v616 = vadd.f32 0.0, %v615
        %v617 = vpop.f32.mrb[0].mxu0
        %v618 = vadd.f32 0.0, %v617
        %619 = vmatprep.mubr.bf16.mxu0 0
        %620 = vmatmul.mubr.bf16.gmra.mrb[0].mxu0 %v505
        %v621 = vpop.f32.mrb[0].mxu0
        %v622 = vadd.f32 0.0, %v621
        %v623 = vpop.f32.mrb[0].mxu0
        %v624 = vadd.f32 0.0, %v623
        %v625 = vpop.f32.mrb[0].mxu0
        %v626 = vadd.f32 0.0, %v625
        %v627 = vpop.f32.mrb[0].mxu0
        %v628 = vadd.f32 0.0, %v627
        %629 = vmatprep.mubr.bf16.mxu0 0
        %630 = vmatmul.mubr.bf16.gmra.mrb[0].mxu0 %v508
        %v631 = vpop.f32.mrb[0].mxu0
        %v632 = vadd.f32 0.0, %v631
        %v633 = vpop.f32.mrb[0].mxu0
        %v634 = vadd.f32 0.0, %v633
        %v635 = vpop.f32.mrb[0].mxu0
        %v636 = vadd.f32 0.0, %v635
        %v637 = vpop.f32.mrb[0].mxu0
        %v638 = vadd.f32 0.0, %v637
        %639 = vmatprep.mubr.bf16.mxu0 0
        %640 = vmatmul.mubr.bf16.gmra.mrb[0].mxu0 %v511
        %v641 = vpop.f32.mrb[0].mxu0
        %v642 = vadd.f32 0.0, %v641
        %v643 = vpop.f32.mrb[0].mxu0
        %v644 = vadd.f32 0.0, %v643
        %v645 = vpop.f32.mrb[0].mxu0
        %v646 = vadd.f32 0.0, %v645
        %v647 = vpop.f32.mrb[0].mxu0
        %v648 = vadd.f32 0.0, %v647
        %649 = vmatprep.mubr.bf16.mxu0 0
        %650 = vmatmul.mubr.bf16.gmra.mrb[0].mxu0 %v514
        %v651 = vpop.f32.mrb[0].mxu0
        %v652 = vadd.f32 0.0, %v651
        %v653 = vpop.f32.mrb[0].mxu0
        %v654 = vadd.f32 0.0, %v653
        %v655 = vpop.f32.mrb[0].mxu0
        %v656 = vadd.f32 0.0, %v655
        %v657 = vpop.f32.mrb[0].mxu0
        %v658 = vadd.f32 0.0, %v657
        %659 = vmatprep.mubr.bf16.mxu0 0
        %660 = vmatmul.mubr.bf16.gmra.mrb[0].mxu0 %v517
        %v661 = vpop.f32.mrb[0].mxu0
        %v662 = vadd.f32 0.0, %v661
        %v663 = vpop.f32.mrb[0].mxu0
        %v664 = vadd.f32 0.0, %v663
        %v665 = vpop.f32.mrb[0].mxu0
        %v666 = vadd.f32 0.0, %v665
        %v667 = vpop.f32.mrb[0].mxu0
        %v668 = vadd.f32 0.0, %v667
        %669 = vmatprep.mubr.bf16.mxu0 0
        %670 = vmatmul.mubr.bf16.gmra.mrb[0].mxu0 %v520
        %v671 = vpop.f32.mrb[0].mxu0
        %v672 = vadd.f32 0.0, %v671
        %v673 = vpop.f32.mrb[0].mxu0
        %v674 = vadd.f32 0.0, %v673
        %v675 = vpop.f32.mrb[0].mxu0
        %v676 = vadd.f32 0.0, %v675
        %v677 = vpop.f32.mrb[0].mxu0
        %v678 = vadd.f32 0.0, %v677
        %679 = vmatprep.mubr.bf16.mxu0 0
        %680 = vmatmul.mubr.bf16.gmra.mrb[0].mxu0 %v523
        %v681 = vpop.f32.mrb[0].mxu0
        %v682 = vadd.f32 0.0, %v681
        %v683 = vpop.f32.mrb[0].mxu0
        %v684 = vadd.f32 0.0, %v683
        %v685 = vpop.f32.mrb[0].mxu0
        %v686 = vadd.f32 0.0, %v685
        %v687 = vpop.f32.mrb[0].mxu0
        %v688 = vadd.f32 0.0, %v687
        %689 = vmatprep.mubr.bf16.mxu0 0
        %690 = vmatmul.mubr.bf16.gmra.mrb[0].mxu0 %v526
        %v691 = vpop.f32.mrb[0].mxu0
        %v692 = vadd.f32 0.0, %v691
        %v693 = vpop.f32.mrb[0].mxu0
        %v694 = vadd.f32 0.0, %v693
        %v695 = vpop.f32.mrb[0].mxu0
        %v696 = vadd.f32 0.0, %v695
        %v697 = vpop.f32.mrb[0].mxu0
        %v698 = vadd.f32 0.0, %v697
        %699 = vmatprep.mubr.bf16.mxu0 0
        %700 = vmatmul.mubr.bf16.gmra.mrb[0].mxu0 %v529
        %v701 = vpop.f32.mrb[0].mxu0
        %v702 = vadd.f32 0.0, %v701
        %v703 = vpop.f32.mrb[0].mxu0
        %v704 = vadd.f32 0.0, %v703
        %v705 = vpop.f32.mrb[0].mxu0
        %v706 = vadd.f32 0.0, %v705
        %v707 = vpop.f32.mrb[0].mxu0
        %v708 = vadd.f32 0.0, %v707
        %709 = vmatprep.mubr.bf16.mxu0 0
        %710 = vmatmul.mubr.bf16.gmra.mrb[0].mxu0 %v532
        %v711 = vpop.f32.mrb[0].mxu0
        %v712 = vadd.f32 0.0, %v711
        %v713 = vpop.f32.mrb[0].mxu0
        %v714 = vadd.f32 0.0, %v713
        %v715 = vpop.f32.mrb[0].mxu0
        %v716 = vadd.f32 0.0, %v715
        %v717 = vpop.f32.mrb[0].mxu0
        %v718 = vadd.f32 0.0, %v717
        %719 = vmatprep.mubr.bf16.mxu0 0
        %720 = vmatmul.mubr.bf16.gmra.mrb[0].mxu0 %v535
        %v721 = vpop.f32.mrb[0].mxu0
        %v722 = vadd.f32 0.0, %v721
        %v723 = vpop.f32.mrb[0].mxu0
        %v724 = vadd.f32 0.0, %v723
        %v725 = vpop.f32.mrb[0].mxu0
        %v726 = vadd.f32 0.0, %v725
        %v727 = vpop.f32.mrb[0].mxu0
        %v728 = vadd.f32 0.0, %v727
        %729 = vmatprep.mubr.bf16.mxu0 0
        %730 = vmatmul.mubr.bf16.gmra.mrb[0].mxu0 %v538
        %v731 = vpop.f32.mrb[0].mxu0
        %v732 = vadd.f32 0.0, %v731
        %v733 = vpop.f32.mrb[0].mxu0
        %v734 = vadd.f32 0.0, %v733
        %v735 = vpop.f32.mrb[0].mxu0
        %v736 = vadd.f32 0.0, %v735
        %v737 = vpop.f32.mrb[0].mxu0
        %v738 = vadd.f32 0.0, %v737
        %739 = vdwg.mxu0
        %v740 = vmax.f32 %v582, %v584
        %741 = vmax.xlane.f32.xlu0 %v740
        %v742 = vpop.xlane.xlu0 %741
        %v743 = vmax.f32 %v586, %v588
        %744 = vmax.xlane.f32.xlu0 %v743
        %v745 = vpop.xlane.xlu0 %744
        %v746 = vmax.f32 %v592, %v594
        %747 = vmax.xlane.f32.xlu0 %v746
        %v748 = vpop.xlane.xlu0 %747
        %v749 = vmax.f32 %v596, %v598
        %750 = vmax.xlane.f32.xlu0 %v749
        %v751 = vpop.xlane.xlu0 %750
        %v752 = vmax.f32 %v602, %v604
        %753 = vmax.xlane.f32.xlu0 %v752
        %v754 = vpop.xlane.xlu0 %753
        %v755 = vmax.f32 %v606, %v608
        %756 = vmax.xlane.f32.xlu0 %v755
        %v757 = vpop.xlane.xlu0 %756
        %v758 = vmax.f32 %v612, %v614
        %759 = vmax.xlane.f32.xlu0 %v758
        %v760 = vpop.xlane.xlu0 %759
        %v761 = vmax.f32 %v616, %v618
        %762 = vmax.xlane.f32.xlu0 %v761
        %v763 = vpop.xlane.xlu0 %762
        %v764 = vmax.f32 %v622, %v624
        %765 = vmax.xlane.f32.xlu0 %v764
        %v766 = vpop.xlane.xlu0 %765
        %v767 = vmax.f32 %v626, %v628
        %768 = vmax.xlane.f32.xlu0 %v767
        %v769 = vpop.xlane.xlu0 %768
        %v770 = vmax.f32 %v632, %v634
        %771 = vmax.xlane.f32.xlu0 %v770
        %v772 = vpop.xlane.xlu0 %771
        %v773 = vmax.f32 %v636, %v638
        %774 = vmax.xlane.f32.xlu0 %v773
        %v775 = vpop.xlane.xlu0 %774
        %v776 = vmax.f32 %v642, %v644
        %777 = vmax.xlane.f32.xlu0 %v776
        %v778 = vpop.xlane.xlu0 %777
        %v779 = vmax.f32 %v646, %v648
        %780 = vmax.xlane.f32.xlu0 %v779
        %v781 = vpop.xlane.xlu0 %780
        %v782 = vmax.f32 %v652, %v654
        %783 = vmax.xlane.f32.xlu0 %v782
        %v784 = vpop.xlane.xlu0 %783
        %v785 = vmax.f32 %v656, %v658
        %786 = vmax.xlane.f32.xlu0 %v785
        %v787 = vpop.xlane.xlu0 %786
        %v788 = vmax.f32 %v662, %v664
        %789 = vmax.xlane.f32.xlu0 %v788
        %v790 = vpop.xlane.xlu0 %789
        %v791 = vmax.f32 %v666, %v668
        %792 = vmax.xlane.f32.xlu0 %v791
        %v793 = vpop.xlane.xlu0 %792
        %v794 = vmax.f32 %v672, %v674
        %795 = vmax.xlane.f32.xlu0 %v794
        %v796 = vpop.xlane.xlu0 %795
        %v797 = vmax.f32 %v676, %v678
        %798 = vmax.xlane.f32.xlu0 %v797
        %v799 = vpop.xlane.xlu0 %798
        %v800 = vmax.f32 %v682, %v684
        %801 = vmax.xlane.f32.xlu0 %v800
        %v802 = vpop.xlane.xlu0 %801
        %v803 = vmax.f32 %v686, %v688
        %804 = vmax.xlane.f32.xlu0 %v803
        %v805 = vpop.xlane.xlu0 %804
        %v806 = vmax.f32 %v692, %v694
        %807 = vmax.xlane.f32.xlu0 %v806
        %v808 = vpop.xlane.xlu0 %807
        %v809 = vmax.f32 %v696, %v698
        %810 = vmax.xlane.f32.xlu0 %v809
        %v811 = vpop.xlane.xlu0 %810
        %v812 = vmax.f32 %v702, %v704
        %813 = vmax.xlane.f32.xlu0 %v812
        %v814 = vpop.xlane.xlu0 %813
        %v815 = vmax.f32 %v706, %v708
        %816 = vmax.xlane.f32.xlu0 %v815
        %v817 = vpop.xlane.xlu0 %816
        %v818 = vmax.f32 %v712, %v714
        %819 = vmax.xlane.f32.xlu0 %v818
        %v820 = vpop.xlane.xlu0 %819
        %v821 = vmax.f32 %v716, %v718
        %822 = vmax.xlane.f32.xlu0 %v821
        %v823 = vpop.xlane.xlu0 %822
        %v824 = vmax.f32 %v722, %v724
        %825 = vmax.xlane.f32.xlu0 %v824
        %v826 = vpop.xlane.xlu0 %825
        %v827 = vmax.f32 %v726, %v728
        %828 = vmax.xlane.f32.xlu0 %v827
        %v829 = vpop.xlane.xlu0 %828
        %v830 = vmax.f32 %v732, %v734
        %831 = vmax.xlane.f32.xlu0 %v830
        %v832 = vpop.xlane.xlu0 %831
        %v833 = vmax.f32 %v736, %v738
        %834 = vmax.xlane.f32.xlu0 %v833
        %v835 = vpop.xlane.xlu0 %834
        %v836 = vsub.f32 %v582, %v742
        %v837 = vsub.f32 %v584, %v742
        %v838 = vsub.f32 %v586, %v745
        %v839 = vsub.f32 %v588, %v745
        %v840 = vsub.f32 %v592, %v748
        %v841 = vsub.f32 %v594, %v748
        %v842 = vsub.f32 %v596, %v751
        %v843 = vsub.f32 %v598, %v751
        %v844 = vsub.f32 %v602, %v754
        %v845 = vsub.f32 %v604, %v754
        %v846 = vsub.f32 %v606, %v757
        %v847 = vsub.f32 %v608, %v757
        %v848 = vsub.f32 %v612, %v760
        %v849 = vsub.f32 %v614, %v760
        %v850 = vsub.f32 %v616, %v763
        %v851 = vsub.f32 %v618, %v763
        %v852 = vsub.f32 %v622, %v766
        %v853 = vsub.f32 %v624, %v766
        %v854 = vsub.f32 %v626, %v769
        %v855 = vsub.f32 %v628, %v769
        %v856 = vsub.f32 %v632, %v772
        %v857 = vsub.f32 %v634, %v772
        %v858 = vsub.f32 %v636, %v775
        %v859 = vsub.f32 %v638, %v775
        %v860 = vsub.f32 %v642, %v778
        %v861 = vsub.f32 %v644, %v778
        %v862 = vsub.f32 %v646, %v781
        %v863 = vsub.f32 %v648, %v781
        %v864 = vsub.f32 %v652, %v784
        %v865 = vsub.f32 %v654, %v784
        %v866 = vsub.f32 %v656, %v787
        %v867 = vsub.f32 %v658, %v787
        %v868 = vsub.f32 %v662, %v790
        %v869 = vsub.f32 %v664, %v790
        %v870 = vsub.f32 %v666, %v793
        %v871 = vsub.f32 %v668, %v793
        %v872 = vsub.f32 %v672, %v796
        %v873 = vsub.f32 %v674, %v796
        %v874 = vsub.f32 %v676, %v799
        %v875 = vsub.f32 %v678, %v799
        %v876 = vsub.f32 %v682, %v802
        %v877 = vsub.f32 %v684, %v802
        %v878 = vsub.f32 %v686, %v805
        %v879 = vsub.f32 %v688, %v805
        %v880 = vsub.f32 %v692, %v808
        %v881 = vsub.f32 %v694, %v808
        %v882 = vsub.f32 %v696, %v811
        %v883 = vsub.f32 %v698, %v811
        %v884 = vsub.f32 %v702, %v814
        %v885 = vsub.f32 %v704, %v814
        %v886 = vsub.f32 %v706, %v817
        %v887 = vsub.f32 %v708, %v817
        %v888 = vsub.f32 %v712, %v820
        %v889 = vsub.f32 %v714, %v820
        %v890 = vsub.f32 %v716, %v823
        %v891 = vsub.f32 %v718, %v823
        %v892 = vsub.f32 %v722, %v826
        %v893 = vsub.f32 %v724, %v826
        %v894 = vsub.f32 %v726, %v829
        %v895 = vsub.f32 %v728, %v829
        %v896 = vsub.f32 %v732, %v832
        %v897 = vsub.f32 %v734, %v832
        %v898 = vsub.f32 %v736, %v835
        %v899 = vsub.f32 %v738, %v835
        %v900 = vmul.f32 %v836, 1.442695
        %v901 = vpow.pop %v900
        %v902 = vmul.f32 %v837, 1.442695
        %v903 = vpow.pop %v902
        %v904 = vmul.f32 %v838, 1.442695
        %v905 = vpow.pop %v904
        %v906 = vmul.f32 %v839, 1.442695
        %v907 = vpow.pop %v906
        %v908 = vmul.f32 %v840, 1.442695
        %v909 = vpow.pop %v908
        %v910 = vmul.f32 %v841, 1.442695
        %v911 = vpow.pop %v910
        %v912 = vmul.f32 %v842, 1.442695
        %v913 = vpow.pop %v912
        %v914 = vmul.f32 %v843, 1.442695
        %v915 = vpow.pop %v914
        %v916 = vmul.f32 %v844, 1.442695
        %v917 = vpow.pop %v916
        %v918 = vmul.f32 %v845, 1.442695
        %v919 = vpow.pop %v918
        %v920 = vmul.f32 %v846, 1.442695
        %v921 = vpow.pop %v920
        %v922 = vmul.f32 %v847, 1.442695
        %v923 = vpow.pop %v922
        %v924 = vmul.f32 %v848, 1.442695
        %v925 = vpow.pop %v924
        %v926 = vmul.f32 %v849, 1.442695
        %v927 = vpow.pop %v926
        %v928 = vmul.f32 %v850, 1.442695
        %v929 = vpow.pop %v928
        %v930 = vmul.f32 %v851, 1.442695
        %v931 = vpow.pop %v930
        %v932 = vmul.f32 %v852, 1.442695
        %v933 = vpow.pop %v932
        %v934 = vmul.f32 %v853, 1.442695
        %v935 = vpow.pop %v934
        %v936 = vmul.f32 %v854, 1.442695
        %v937 = vpow.pop %v936
        %v938 = vmul.f32 %v855, 1.442695
        %v939 = vpow.pop %v938
        %v940 = vmul.f32 %v856, 1.442695
        %v941 = vpow.pop %v940
        %v942 = vmul.f32 %v857, 1.442695
        %v943 = vpow.pop %v942
        %v944 = vmul.f32 %v858, 1.442695
        %v945 = vpow.pop %v944
        %v946 = vmul.f32 %v859, 1.442695
        %v947 = vpow.pop %v946
        %v948 = vmul.f32 %v860, 1.442695
        %v949 = vpow.pop %v948
        %v950 = vmul.f32 %v861, 1.442695
        %v951 = vpow.pop %v950
        %v952 = vmul.f32 %v862, 1.442695
        %v953 = vpow.pop %v952
        %v954 = vmul.f32 %v863, 1.442695
        %v955 = vpow.pop %v954
        %v956 = vmul.f32 %v864, 1.442695
        %v957 = vpow.pop %v956
        %v958 = vmul.f32 %v865, 1.442695
        %v959 = vpow.pop %v958
        %v960 = vmul.f32 %v866, 1.442695
        %v961 = vpow.pop %v960
        %v962 = vmul.f32 %v867, 1.442695
        %v963 = vpow.pop %v962
        %v964 = vmul.f32 %v868, 1.442695
        %v965 = vpow.pop %v964
        %v966 = vmul.f32 %v869, 1.442695
        %v967 = vpow.pop %v966
        %v968 = vmul.f32 %v870, 1.442695
        %v969 = vpow.pop %v968
        %v970 = vmul.f32 %v871, 1.442695
        %v971 = vpow.pop %v970
        %v972 = vmul.f32 %v872, 1.442695
        %v973 = vpow.pop %v972
        %v974 = vmul.f32 %v873, 1.442695
        %v975 = vpow.pop %v974
        %v976 = vmul.f32 %v874, 1.442695
        %v977 = vpow.pop %v976
        %v978 = vmul.f32 %v875, 1.442695
        %v979 = vpow.pop %v978
        %v980 = vmul.f32 %v876, 1.442695
        %v981 = vpow.pop %v980
        %v982 = vmul.f32 %v877, 1.442695
        %v983 = vpow.pop %v982
        %v984 = vmul.f32 %v878, 1.442695
        %v985 = vpow.pop %v984
        %v986 = vmul.f32 %v879, 1.442695
        %v987 = vpow.pop %v986
        %v988 = vmul.f32 %v880, 1.442695
        %v989 = vpow.pop %v988
        %v990 = vmul.f32 %v881, 1.442695
        %v991 = vpow.pop %v990
        %v992 = vmul.f32 %v882, 1.442695
        %v993 = vpow.pop %v992
        %v994 = vmul.f32 %v883, 1.442695
        %v995 = vpow.pop %v994
        %v996 = vmul.f32 %v884, 1.442695
        %v997 = vpow.pop %v996
        %v998 = vmul.f32 %v885, 1.442695
        %v999 = vpow.pop %v998
        %v1000 = vmul.f32 %v886, 1.442695
        %v1001 = vpow.pop %v1000
        %v1002 = vmul.f32 %v887, 1.442695
        %v1003 = vpow.pop %v1002
        %v1004 = vmul.f32 %v888, 1.442695
        %v1005 = vpow.pop %v1004
        %v1006 = vmul.f32 %v889, 1.442695
        %v1007 = vpow.pop %v1006
        %v1008 = vmul.f32 %v890, 1.442695
        %v1009 = vpow.pop %v1008
        %v1010 = vmul.f32 %v891, 1.442695
        %v1011 = vpow.pop %v1010
        %v1012 = vmul.f32 %v892, 1.442695
        %v1013 = vpow.pop %v1012
        %v1014 = vmul.f32 %v893, 1.442695
        %v1015 = vpow.pop %v1014
        %v1016 = vmul.f32 %v894, 1.442695
        %v1017 = vpow.pop %v1016
        %v1018 = vmul.f32 %v895, 1.442695
        %v1019 = vpow.pop %v1018
        %v1020 = vmul.f32 %v896, 1.442695
        %v1021 = vpow.pop %v1020
        %v1022 = vmul.f32 %v897, 1.442695
        %v1023 = vpow.pop %v1022
        %v1024 = vmul.f32 %v898, 1.442695
        %v1025 = vpow.pop %v1024
        %v1026 = vmul.f32 %v899, 1.442695
        %v1027 = vpow.pop %v1026
        %v1028 = vadd.f32 %v901, %v903
        %1029 = vadd.xlane.f32.xlu0 %v1028
        %v1030 = vpop.xlane.xlu0 %1029
        %v1031 = vadd.f32 %v905, %v907
        %1032 = vadd.xlane.f32.xlu0 %v1031
        %v1033 = vpop.xlane.xlu0 %1032
        %v1034 = vadd.f32 %v909, %v911
        %1035 = vadd.xlane.f32.xlu0 %v1034
        %v1036 = vpop.xlane.xlu0 %1035
        %v1037 = vadd.f32 %v913, %v915
        %1038 = vadd.xlane.f32.xlu0 %v1037
        %v1039 = vpop.xlane.xlu0 %1038
        %v1040 = vadd.f32 %v917, %v919
        %1041 = vadd.xlane.f32.xlu0 %v1040
        %v1042 = vpop.xlane.xlu0 %1041
        %v1043 = vadd.f32 %v921, %v923
        %1044 = vadd.xlane.f32.xlu0 %v1043
        %v1045 = vpop.xlane.xlu0 %1044
        %v1046 = vadd.f32 %v925, %v927
        %1047 = vadd.xlane.f32.xlu0 %v1046
        %v1048 = vpop.xlane.xlu0 %1047
        %v1049 = vadd.f32 %v929, %v931
        %1050 = vadd.xlane.f32.xlu0 %v1049
        %v1051 = vpop.xlane.xlu0 %1050
        %v1052 = vadd.f32 %v933, %v935
        %1053 = vadd.xlane.f32.xlu0 %v1052
        %v1054 = vpop.xlane.xlu0 %1053
        %v1055 = vadd.f32 %v937, %v939
        %1056 = vadd.xlane.f32.xlu0 %v1055
        %v1057 = vpop.xlane.xlu0 %1056
        %v1058 = vadd.f32 %v941, %v943
        %1059 = vadd.xlane.f32.xlu0 %v1058
        %v1060 = vpop.xlane.xlu0 %1059
        %v1061 = vadd.f32 %v945, %v947
        %1062 = vadd.xlane.f32.xlu0 %v1061
        %v1063 = vpop.xlane.xlu0 %1062
        %v1064 = vadd.f32 %v949, %v951
        %1065 = vadd.xlane.f32.xlu0 %v1064
        %v1066 = vpop.xlane.xlu0 %1065
        %v1067 = vadd.f32 %v953, %v955
        %1068 = vadd.xlane.f32.xlu0 %v1067
        %v1069 = vpop.xlane.xlu0 %1068
        %v1070 = vadd.f32 %v957, %v959
        %1071 = vadd.xlane.f32.xlu0 %v1070
        %v1072 = vpop.xlane.xlu0 %1071
        %v1073 = vadd.f32 %v961, %v963
        %1074 = vadd.xlane.f32.xlu0 %v1073
        %v1075 = vpop.xlane.xlu0 %1074
        %v1076 = vadd.f32 %v965, %v967
        %1077 = vadd.xlane.f32.xlu0 %v1076
        %v1078 = vpop.xlane.xlu0 %1077
        %v1079 = vadd.f32 %v969, %v971
        %1080 = vadd.xlane.f32.xlu0 %v1079
        %v1081 = vpop.xlane.xlu0 %1080
        %v1082 = vadd.f32 %v973, %v975
        %1083 = vadd.xlane.f32.xlu0 %v1082
        %v1084 = vpop.xlane.xlu0 %1083
        %v1085 = vadd.f32 %v977, %v979
        %1086 = vadd.xlane.f32.xlu0 %v1085
        %v1087 = vpop.xlane.xlu0 %1086
        %v1088 = vadd.f32 %v981, %v983
        %1089 = vadd.xlane.f32.xlu0 %v1088
        %v1090 = vpop.xlane.xlu0 %1089
        %v1091 = vadd.f32 %v985, %v987
        %1092 = vadd.xlane.f32.xlu0 %v1091
        %v1093 = vpop.xlane.xlu0 %1092
        %v1094 = vadd.f32 %v989, %v991
        %1095 = vadd.xlane.f32.xlu0 %v1094
        %v1096 = vpop.xlane.xlu0 %1095
        %v1097 = vadd.f32 %v993, %v995
        %1098 = vadd.xlane.f32.xlu0 %v1097
        %v1099 = vpop.xlane.xlu0 %1098
        %v1100 = vadd.f32 %v997, %v999
        %1101 = vadd.xlane.f32.xlu0 %v1100
        %v1102 = vpop.xlane.xlu0 %1101
        %v1103 = vadd.f32 %v1001, %v1003
        %1104 = vadd.xlane.f32.xlu0 %v1103
        %v1105 = vpop.xlane.xlu0 %1104
        %v1106 = vadd.f32 %v1005, %v1007
        %1107 = vadd.xlane.f32.xlu0 %v1106
        %v1108 = vpop.xlane.xlu0 %1107
        %v1109 = vadd.f32 %v1009, %v1011
        %1110 = vadd.xlane.f32.xlu0 %v1109
        %v1111 = vpop.xlane.xlu0 %1110
        %v1112 = vadd.f32 %v1013, %v1015
        %1113 = vadd.xlane.f32.xlu0 %v1112
        %v1114 = vpop.xlane.xlu0 %1113
        %v1115 = vadd.f32 %v1017, %v1019
        %1116 = vadd.xlane.f32.xlu0 %v1115
        %v1117 = vpop.xlane.xlu0 %1116
        %v1118 = vadd.f32 %v1021, %v1023
        %1119 = vadd.xlane.f32.xlu0 %v1118
        %v1120 = vpop.xlane.xlu0 %1119
        %v1121 = vadd.f32 %v1025, %v1027
        %1122 = vadd.xlane.f32.xlu0 %v1121
        %v1123 = vpop.xlane.xlu0 %1122
        %v1124 = vrcp.pop %v1030
        %v1125 = vrcp.pop %v1033
        %v1126 = vrcp.pop %v1036
        %v1127 = vrcp.pop %v1039
        %v1128 = vrcp.pop %v1042
        %v1129 = vrcp.pop %v1045
        %v1130 = vrcp.pop %v1048
        %v1131 = vrcp.pop %v1051
        %v1132 = vrcp.pop %v1054
        %v1133 = vrcp.pop %v1057
        %v1134 = vrcp.pop %v1060
        %v1135 = vrcp.pop %v1063
        %v1136 = vrcp.pop %v1066
        %v1137 = vrcp.pop %v1069
        %v1138 = vrcp.pop %v1072
        %v1139 = vrcp.pop %v1075
        %v1140 = vrcp.pop %v1078
        %v1141 = vrcp.pop %v1081
        %v1142 = vrcp.pop %v1084
        %v1143 = vrcp.pop %v1087
        %v1144 = vrcp.pop %v1090
        %v1145 = vrcp.pop %v1093
        %v1146 = vrcp.pop %v1096
        %v1147 = vrcp.pop %v1099
        %v1148 = vrcp.pop %v1102
        %v1149 = vrcp.pop %v1105
        %v1150 = vrcp.pop %v1108
        %v1151 = vrcp.pop %v1111
        %v1152 = vrcp.pop %v1114
        %v1153 = vrcp.pop %v1117
        %v1154 = vrcp.pop %v1120
        %v1155 = vrcp.pop %v1123
        %v1156 = vmul.f32 %v901, %v1124
        %v1157 = vmul.f32 %v903, %v1124
        %v1158 = vmul.f32 %v905, %v1125
        %v1159 = vmul.f32 %v907, %v1125
        %v1160 = vmul.f32 %v909, %v1126
        %v1161 = vmul.f32 %v911, %v1126
        %v1162 = vmul.f32 %v913, %v1127
        %v1163 = vmul.f32 %v915, %v1127
        %v1164 = vmul.f32 %v917, %v1128
        %v1165 = vmul.f32 %v919, %v1128
        %v1166 = vmul.f32 %v921, %v1129
        %v1167 = vmul.f32 %v923, %v1129
        %v1168 = vmul.f32 %v925, %v1130
        %v1169 = vmul.f32 %v927, %v1130
        %v1170 = vmul.f32 %v929, %v1131
        %v1171 = vmul.f32 %v931, %v1131
        %v1172 = vmul.f32 %v933, %v1132
        %v1173 = vmul.f32 %v935, %v1132
        %v1174 = vmul.f32 %v937, %v1133
        %v1175 = vmul.f32 %v939, %v1133
        %v1176 = vmul.f32 %v941, %v1134
        %v1177 = vmul.f32 %v943, %v1134
        %v1178 = vmul.f32 %v945, %v1135
        %v1179 = vmul.f32 %v947, %v1135
        %v1180 = vmul.f32 %v949, %v1136
        %v1181 = vmul.f32 %v951, %v1136
        %v1182 = vmul.f32 %v953, %v1137
        %v1183 = vmul.f32 %v955, %v1137
        %v1184 = vmul.f32 %v957, %v1138
        %v1185 = vmul.f32 %v959, %v1138
        %v1186 = vmul.f32 %v961, %v1139
        %v1187 = vmul.f32 %v963, %v1139
        %v1188 = vmul.f32 %v965, %v1140
        %v1189 = vmul.f32 %v967, %v1140
        %v1190 = vmul.f32 %v969, %v1141
        %v1191 = vmul.f32 %v971, %v1141
        %v1192 = vmul.f32 %v973, %v1142
        %v1193 = vmul.f32 %v975, %v1142
        %v1194 = vmul.f32 %v977, %v1143
        %v1195 = vmul.f32 %v979, %v1143
        %v1196 = vmul.f32 %v981, %v1144
        %v1197 = vmul.f32 %v983, %v1144
        %v1198 = vmul.f32 %v985, %v1145
        %v1199 = vmul.f32 %v987, %v1145
        %v1200 = vmul.f32 %v989, %v1146
        %v1201 = vmul.f32 %v991, %v1146
        %v1202 = vmul.f32 %v993, %v1147
        %v1203 = vmul.f32 %v995, %v1147
        %v1204 = vmul.f32 %v997, %v1148
        %v1205 = vmul.f32 %v999, %v1148
        %v1206 = vmul.f32 %v1001, %v1149
        %v1207 = vmul.f32 %v1003, %v1149
        %v1208 = vmul.f32 %v1005, %v1150
        %v1209 = vmul.f32 %v1007, %v1150
        %v1210 = vmul.f32 %v1009, %v1151
        %v1211 = vmul.f32 %v1011, %v1151
        %v1212 = vmul.f32 %v1013, %v1152
        %v1213 = vmul.f32 %v1015, %v1152
        %v1214 = vmul.f32 %v1017, %v1153
        %v1215 = vmul.f32 %v1019, %v1153
        %v1216 = vmul.f32 %v1021, %v1154
        %v1217 = vmul.f32 %v1023, %v1154
        %v1218 = vmul.f32 %v1025, %v1155
        %v1219 = vmul.f32 %v1027, %v1155
        %1220 = vst [vmem:[%s254] sm:$0xff] %v1156
        %1221 = vst [vmem:[%s254 + $0x8] sm:$0xff] %v1157
        %1222 = vst [vmem:[%s254 + $0x10] sm:$0xff] %v1158
        %1223 = vst [vmem:[%s254 + $0x18] sm:$0xff] %v1159
        %1224 = vst [vmem:[%s254 + $0x20] sm:$0xff] %v1160
        %1225 = vst [vmem:[%s254 + $0x28] sm:$0xff] %v1161
        %1226 = vst [vmem:[%s254 + $0x30] sm:$0xff] %v1162
        %1227 = vst [vmem:[%s254 + $0x38] sm:$0xff] %v1163
        %1228 = vst [vmem:[%s254 + $0x40] sm:$0xff] %v1164
        %1229 = vst [vmem:[%s254 + $0x48] sm:$0xff] %v1165
        %1230 = vst [vmem:[%s254 + $0x50] sm:$0xff] %v1166
        %1231 = vst [vmem:[%s254 + $0x58] sm:$0xff] %v1167
        %1232 = vst [vmem:[%s254 + $0x60] sm:$0xff] %v1168
        %1233 = vst [vmem:[%s254 + $0x68] sm:$0xff] %v1169
        %1234 = vst [vmem:[%s254 + $0x70] sm:$0xff] %v1170
        %1235 = vst [vmem:[%s254 + $0x78] sm:$0xff] %v1171
        %1236 = vst [vmem:[%s254 + $0x80] sm:$0xff] %v1172
        %1237 = vst [vmem:[%s254 + $0x88] sm:$0xff] %v1173
        %1238 = vst [vmem:[%s254 + $0x90] sm:$0xff] %v1174
        %1239 = vst [vmem:[%s254 + $0x98] sm:$0xff] %v1175
        %1240 = vst [vmem:[%s254 + $0xa0] sm:$0xff] %v1176
        %1241 = vst [vmem:[%s254 + $0xa8] sm:$0xff] %v1177
        %1242 = vst [vmem:[%s254 + $0xb0] sm:$0xff] %v1178
        %1243 = vst [vmem:[%s254 + $0xb8] sm:$0xff] %v1179
        %1244 = vst [vmem:[%s254 + $0xc0] sm:$0xff] %v1180
        %1245 = vst [vmem:[%s254 + $0xc8] sm:$0xff] %v1181
        %1246 = vst [vmem:[%s254 + $0xd0] sm:$0xff] %v1182
        %1247 = vst [vmem:[%s254 + $0xd8] sm:$0xff] %v1183
        %1248 = vst [vmem:[%s254 + $0xe0] sm:$0xff] %v1184
        %1249 = vst [vmem:[%s254 + $0xe8] sm:$0xff] %v1185
        %1250 = vst [vmem:[%s254 + $0xf0] sm:$0xff] %v1186
        %1251 = vst [vmem:[%s254 + $0xf8] sm:$0xff] %v1187
        %1252 = vst [vmem:[%s254 + $0x100] sm:$0xff] %v1188
        %1253 = vst [vmem:[%s254 + $0x108] sm:$0xff] %v1189
        %1254 = vst [vmem:[%s254 + $0x110] sm:$0xff] %v1190
        %1255 = vst [vmem:[%s254 + $0x118] sm:$0xff] %v1191
        %1256 = vst [vmem:[%s254 + $0x120] sm:$0xff] %v1192
        %1257 = vst [vmem:[%s254 + $0x128] sm:$0xff] %v1193
        %1258 = vst [vmem:[%s254 + $0x130] sm:$0xff] %v1194
        %1259 = vst [vmem:[%s254 + $0x138] sm:$0xff] %v1195
        %1260 = vst [vmem:[%s254 + $0x140] sm:$0xff] %v1196
        %1261 = vst [vmem:[%s254 + $0x148] sm:$0xff] %v1197
        %1262 = vst [vmem:[%s254 + $0x150] sm:$0xff] %v1198
        %1263 = vst [vmem:[%s254 + $0x158] sm:$0xff] %v1199
        %1264 = vst [vmem:[%s254 + $0x160] sm:$0xff] %v1200
        %1265 = vst [vmem:[%s254 + $0x168] sm:$0xff] %v1201
        %1266 = vst [vmem:[%s254 + $0x170] sm:$0xff] %v1202
        %1267 = vst [vmem:[%s254 + $0x178] sm:$0xff] %v1203
        %1268 = vst [vmem:[%s254 + $0x180] sm:$0xff] %v1204
        %1269 = vst [vmem:[%s254 + $0x188] sm:$0xff] %v1205
        %1270 = vst [vmem:[%s254 + $0x190] sm:$0xff] %v1206
        %1271 = vst [vmem:[%s254 + $0x198] sm:$0xff] %v1207
        %1272 = vst [vmem:[%s254 + $0x1a0] sm:$0xff] %v1208
        %1273 = vst [vmem:[%s254 + $0x1a8] sm:$0xff] %v1209
        %1274 = vst [vmem:[%s254 + $0x1b0] sm:$0xff] %v1210
        %1275 = vst [vmem:[%s254 + $0x1b8] sm:$0xff] %v1211
        %1276 = vst [vmem:[%s254 + $0x1c0] sm:$0xff] %v1212
        %1277 = vst [vmem:[%s254 + $0x1c8] sm:$0xff] %v1213
        %1278 = vst [vmem:[%s254 + $0x1d0] sm:$0xff] %v1214
        %1279 = vst [vmem:[%s254 + $0x1d8] sm:$0xff] %v1215
        %1280 = vst [vmem:[%s254 + $0x1e0] sm:$0xff] %v1216
        %1281 = vst [vmem:[%s254 + $0x1e8] sm:$0xff] %v1217
        %1282 = vst [vmem:[%s254 + $0x1f0] sm:$0xff] %v1218
        %1283 = vst [vmem:[%s254 + $0x1f8] sm:$0xff] %v1219
        %1284 = vxpose.xlu0.b32.start [1/16] %v417, 128
        %1285 = vxpose.xlu0.b32.cont [2/16] %v421, 128
        %1286 = vxpose.xlu0.b32.cont [3/16] %v427, 128
        %1287 = vxpose.xlu0.b32.cont [4/16] %v431, 128
        %1288 = vxpose.xlu0.b32.cont [5/16] %v437, 128
        %1289 = vxpose.xlu0.b32.cont [6/16] %v441, 128
        %1290 = vxpose.xlu0.b32.cont [7/16] %v447, 128
        %1291 = vxpose.xlu0.b32.cont [8/16] %v451, 128
        %1292 = vxpose.xlu0.b32.cont [9/16] 0.0, 128
        %1293 = vxpose.xlu0.b32.cont [10/16] 0.0, 128
        %1294 = vxpose.xlu0.b32.cont [11/16] 0.0, 128
        %1295 = vxpose.xlu0.b32.cont [12/16] 0.0, 128
        %1296 = vxpose.xlu0.b32.cont [13/16] 0.0, 128
        %1297 = vxpose.xlu0.b32.cont [14/16] 0.0, 128
        %1298 = vxpose.xlu0.b32.cont [15/16] 0.0, 128
        %1299 = vxpose.xlu0.b32.end [16/16] 0.0, 128
        %v1300 = vpop.trf.xlu0
        %v1301 = vpop.trf.xlu0
        %v1302 = vpop.trf.xlu0
        %v1303 = vpop.trf.xlu0
        %v1304 = vpop.trf.xlu0
        %v1305 = vpop.trf.xlu0
        %v1306 = vpop.trf.xlu0
        %v1307 = vpop.trf.xlu0
        %v1308 = vpop.trf.xlu0
        %v1309 = vpop.trf.xlu0
        %v1310 = vpop.trf.xlu0
        %v1311 = vpop.trf.xlu0
        %v1312 = vpop.trf.xlu0
        %v1313 = vpop.trf.xlu0
        %v1314 = vpop.trf.xlu0
        %v1315 = vpop.trf.xlu0
        %1316 = vxpose.xlu0.b32.start [1/16] %v419, 128
        %1317 = vxpose.xlu0.b32.cont [2/16] %v423, 128
        %1318 = vxpose.xlu0.b32.cont [3/16] %v429, 128
        %1319 = vxpose.xlu0.b32.cont [4/16] %v433, 128
        %1320 = vxpose.xlu0.b32.cont [5/16] %v439, 128
        %1321 = vxpose.xlu0.b32.cont [6/16] %v443, 128
        %1322 = vxpose.xlu0.b32.cont [7/16] %v449, 128
        %1323 = vxpose.xlu0.b32.cont [8/16] %v453, 128
        %1324 = vxpose.xlu0.b32.cont [9/16] 0.0, 128
        %1325 = vxpose.xlu0.b32.cont [10/16] 0.0, 128
        %1326 = vxpose.xlu0.b32.cont [11/16] 0.0, 128
        %1327 = vxpose.xlu0.b32.cont [12/16] 0.0, 128
        %1328 = vxpose.xlu0.b32.cont [13/16] 0.0, 128
        %1329 = vxpose.xlu0.b32.cont [14/16] 0.0, 128
        %1330 = vxpose.xlu0.b32.cont [15/16] 0.0, 128
        %1331 = vxpose.xlu0.b32.end [16/16] 0.0, 128
        %v1332 = vpop.trf.xlu0
        %v1333 = vpop.trf.xlu0
        %v1334 = vpop.trf.xlu0
        %v1335 = vpop.trf.xlu0
        %v1336 = vpop.trf.xlu0
        %v1337 = vpop.trf.xlu0
        %v1338 = vpop.trf.xlu0
        %v1339 = vpop.trf.xlu0
        %v1340 = vpop.trf.xlu0
        %v1341 = vpop.trf.xlu0
        %v1342 = vpop.trf.xlu0
        %v1343 = vpop.trf.xlu0
        %v1344 = vpop.trf.xlu0
        %v1345 = vpop.trf.xlu0
        %v1346 = vpop.trf.xlu0
        %v1347 = vpop.trf.xlu0
        %v1348 = vpack.c.bf16 %v1301, %v1300
        %v1349 = vpack.c.bf16 %v1303, %v1302
        %v1350 = vpack.c.bf16 %v1305, %v1304
        %v1351 = vpack.c.bf16 %v1307, %v1306
        %v1352 = vpack.c.bf16 %v1309, %v1308
        %v1353 = vpack.c.bf16 %v1311, %v1310
        %v1354 = vpack.c.bf16 %v1313, %v1312
        %v1355 = vpack.c.bf16 %v1315, %v1314
        %v1356 = vpack.c.bf16 %v1333, %v1332
        %v1357 = vpack.c.bf16 %v1335, %v1334
        %v1358 = vpack.c.bf16 %v1337, %v1336
        %v1359 = vpack.c.bf16 %v1339, %v1338
        %v1360 = vpack.c.bf16 %v1341, %v1340
        %v1361 = vpack.c.bf16 %v1343, %v1342
        %v1362 = vpack.c.bf16 %v1345, %v1344
        %v1363 = vpack.c.bf16 %v1347, %v1346
        %v1364 = vld [vmem:[%s254] sm:$0xff]
        %v1365 = vld [vmem:[%s254 + $0x8] sm:$0xff]
        %v1366 = vld [vmem:[%s254 + $0x10] sm:$0xff]
        %v1367 = vld [vmem:[%s254 + $0x18] sm:$0xff]
        %v1368 = vld [vmem:[%s254 + $0x20] sm:$0xff]
        %v1369 = vld [vmem:[%s254 + $0x28] sm:$0xff]
        %v1370 = vld [vmem:[%s254 + $0x30] sm:$0xff]
        %v1371 = vld [vmem:[%s254 + $0x38] sm:$0xff]
        %v1372 = vld [vmem:[%s254 + $0x40] sm:$0xff]
        %v1373 = vld [vmem:[%s254 + $0x48] sm:$0xff]
        %v1374 = vld [vmem:[%s254 + $0x50] sm:$0xff]
        %v1375 = vld [vmem:[%s254 + $0x58] sm:$0xff]
        %v1376 = vld [vmem:[%s254 + $0x60] sm:$0xff]
        %v1377 = vld [vmem:[%s254 + $0x68] sm:$0xff]
        %v1378 = vld [vmem:[%s254 + $0x70] sm:$0xff]
        %v1379 = vld [vmem:[%s254 + $0x78] sm:$0xff]
        %v1380 = vld [vmem:[%s254 + $0x80] sm:$0xff]
        %v1381 = vld [vmem:[%s254 + $0x88] sm:$0xff]
        %v1382 = vld [vmem:[%s254 + $0x90] sm:$0xff]
        %v1383 = vld [vmem:[%s254 + $0x98] sm:$0xff]
        %v1384 = vld [vmem:[%s254 + $0xa0] sm:$0xff]
        %v1385 = vld [vmem:[%s254 + $0xa8] sm:$0xff]
        %v1386 = vld [vmem:[%s254 + $0xb0] sm:$0xff]
        %v1387 = vld [vmem:[%s254 + $0xb8] sm:$0xff]
        %v1388 = vld [vmem:[%s254 + $0xc0] sm:$0xff]
        %v1389 = vld [vmem:[%s254 + $0xc8] sm:$0xff]
        %v1390 = vld [vmem:[%s254 + $0xd0] sm:$0xff]
        %v1391 = vld [vmem:[%s254 + $0xd8] sm:$0xff]
        %v1392 = vld [vmem:[%s254 + $0xe0] sm:$0xff]
        %v1393 = vld [vmem:[%s254 + $0xe8] sm:$0xff]
        %v1394 = vld [vmem:[%s254 + $0xf0] sm:$0xff]
        %v1395 = vld [vmem:[%s254 + $0xf8] sm:$0xff]
        %v1396 = vld [vmem:[%s254 + $0x100] sm:$0xff]
        %v1397 = vld [vmem:[%s254 + $0x108] sm:$0xff]
        %v1398 = vld [vmem:[%s254 + $0x110] sm:$0xff]
        %v1399 = vld [vmem:[%s254 + $0x118] sm:$0xff]
        %v1400 = vld [vmem:[%s254 + $0x120] sm:$0xff]
        %v1401 = vld [vmem:[%s254 + $0x128] sm:$0xff]
        %v1402 = vld [vmem:[%s254 + $0x130] sm:$0xff]
        %v1403 = vld [vmem:[%s254 + $0x138] sm:$0xff]
        %v1404 = vld [vmem:[%s254 + $0x140] sm:$0xff]
        %v1405 = vld [vmem:[%s254 + $0x148] sm:$0xff]
        %v1406 = vld [vmem:[%s254 + $0x150] sm:$0xff]
        %v1407 = vld [vmem:[%s254 + $0x158] sm:$0xff]
        %v1408 = vld [vmem:[%s254 + $0x160] sm:$0xff]
        %v1409 = vld [vmem:[%s254 + $0x168] sm:$0xff]
        %v1410 = vld [vmem:[%s254 + $0x170] sm:$0xff]
        %v1411 = vld [vmem:[%s254 + $0x178] sm:$0xff]
        %v1412 = vld [vmem:[%s254 + $0x180] sm:$0xff]
        %v1413 = vld [vmem:[%s254 + $0x188] sm:$0xff]
        %v1414 = vld [vmem:[%s254 + $0x190] sm:$0xff]
        %v1415 = vld [vmem:[%s254 + $0x198] sm:$0xff]
        %v1416 = vld [vmem:[%s254 + $0x1a0] sm:$0xff]
        %v1417 = vld [vmem:[%s254 + $0x1a8] sm:$0xff]
        %v1418 = vld [vmem:[%s254 + $0x1b0] sm:$0xff]
        %v1419 = vld [vmem:[%s254 + $0x1b8] sm:$0xff]
        %v1420 = vld [vmem:[%s254 + $0x1c0] sm:$0xff]
        %v1421 = vld [vmem:[%s254 + $0x1c8] sm:$0xff]
        %v1422 = vld [vmem:[%s254 + $0x1d0] sm:$0xff]
        %v1423 = vld [vmem:[%s254 + $0x1d8] sm:$0xff]
        %v1424 = vld [vmem:[%s254 + $0x1e0] sm:$0xff]
        %v1425 = vld [vmem:[%s254 + $0x1e8] sm:$0xff]
        %v1426 = vld [vmem:[%s254 + $0x1f0] sm:$0xff]
        %v1427 = vld [vmem:[%s254 + $0x1f8] sm:$0xff]
        %v1428 = vpack.c.bf16 %v1366, %v1364
        %v1429 = vpack.c.bf16 %v1367, %v1365
        %v1430 = vpack.c.bf16 %v1370, %v1368
        %v1431 = vpack.c.bf16 %v1371, %v1369
        %v1432 = vpack.c.bf16 %v1374, %v1372
        %v1433 = vpack.c.bf16 %v1375, %v1373
        %v1434 = vpack.c.bf16 %v1378, %v1376
        %v1435 = vpack.c.bf16 %v1379, %v1377
        %v1436 = vpack.c.bf16 %v1382, %v1380
        %v1437 = vpack.c.bf16 %v1383, %v1381
        %v1438 = vpack.c.bf16 %v1386, %v1384
        %v1439 = vpack.c.bf16 %v1387, %v1385
        %v1440 = vpack.c.bf16 %v1390, %v1388
        %v1441 = vpack.c.bf16 %v1391, %v1389
        %v1442 = vpack.c.bf16 %v1394, %v1392
        %v1443 = vpack.c.bf16 %v1395, %v1393
        %v1444 = vpack.c.bf16 %v1398, %v1396
        %v1445 = vpack.c.bf16 %v1399, %v1397
        %v1446 = vpack.c.bf16 %v1402, %v1400
        %v1447 = vpack.c.bf16 %v1403, %v1401
        %v1448 = vpack.c.bf16 %v1406, %v1404
        %v1449 = vpack.c.bf16 %v1407, %v1405
        %v1450 = vpack.c.bf16 %v1410, %v1408
        %v1451 = vpack.c.bf16 %v1411, %v1409
        %v1452 = vpack.c.bf16 %v1414, %v1412
        %v1453 = vpack.c.bf16 %v1415, %v1413
        %v1454 = vpack.c.bf16 %v1418, %v1416
        %v1455 = vpack.c.bf16 %v1419, %v1417
        %v1456 = vpack.c.bf16 %v1422, %v1420
        %v1457 = vpack.c.bf16 %v1423, %v1421
        %v1458 = vpack.c.bf16 %v1426, %v1424
        %v1459 = vpack.c.bf16 %v1427, %v1425
        %1460 = vmatprep.subr.bf16.mxu0 0
        %1461 = vmatpush1.bf16.msra.mxu0 %v1348
        %1462 = vmatprep.subr.bf16.mxu0 0
        %1463 = vmatpush1.bf16.msra.mxu0 %v1349
        %1464 = vmatprep.subr.bf16.mxu0 0
        %1465 = vmatpush1.bf16.msra.mxu0 %v1350
        %1466 = vmatprep.subr.bf16.mxu0 0
        %1467 = vmatpush1.bf16.msra.mxu0 %v1351
        %1468 = vmatprep.subr.bf16.mxu0 0
        %1469 = vmatpush1.bf16.msra.mxu0 %v1352
        %1470 = vmatprep.subr.bf16.mxu0 0
        %1471 = vmatpush1.bf16.msra.mxu0 %v1353
        %1472 = vmatprep.subr.bf16.mxu0 0
        %1473 = vmatpush1.bf16.msra.mxu0 %v1354
        %1474 = vmatprep.subr.bf16.mxu0 0
        %1475 = vmatpush1.bf16.msra.mxu0 %v1355
        %1476 = vmatprep.subr.bf16.mxu0 0
        %1477 = vmatpush1.bf16.msra.mxu0 %v1356
        %1478 = vmatprep.subr.bf16.mxu0 0
        %1479 = vmatpush1.bf16.msra.mxu0 %v1357
        %1480 = vmatprep.subr.bf16.mxu0 0
        %1481 = vmatpush1.bf16.msra.mxu0 %v1358
        %1482 = vmatprep.subr.bf16.mxu0 0
        %1483 = vmatpush1.bf16.msra.mxu0 %v1359
        %1484 = vmatprep.subr.bf16.mxu0 0
        %1485 = vmatpush1.bf16.msra.mxu0 %v1360
        %1486 = vmatprep.subr.bf16.mxu0 0
        %1487 = vmatpush1.bf16.msra.mxu0 %v1361
        %1488 = vmatprep.subr.bf16.mxu0 0
        %1489 = vmatpush1.bf16.msra.mxu0 %v1362
        %1490 = vmatprep.subr.bf16.mxu0 0
        %1491 = vmatpush1.bf16.msra.mxu0 %v1363
        %1492 = vmatprep.mubr.bf16.mxu0 %v1429
        %1493 = vmatmul.mubr.bf16.gmra.mrb[0].mxu0 %v1428
        %v1494 = vpop.f32.mrb[0].mxu0
        %v1495 = vadd.f32 0.0, %v1494
        %v1496 = vpop.f32.mrb[0].mxu0
        %v1497 = vpop.f32.mrb[0].mxu0
        %v1498 = vadd.f32 0.0, %v1497
        %v1499 = vpop.f32.mrb[0].mxu0
        %1500 = vmatprep.mubr.bf16.mxu0 %v1431
        %1501 = vmatmul.mubr.bf16.gmra.mrb[0].mxu0 %v1430
        %v1502 = vpop.f32.mrb[0].mxu0
        %v1503 = vadd.f32 0.0, %v1502
        %v1504 = vpop.f32.mrb[0].mxu0
        %v1505 = vpop.f32.mrb[0].mxu0
        %v1506 = vadd.f32 0.0, %v1505
        %v1507 = vpop.f32.mrb[0].mxu0
        %1508 = vmatprep.mubr.bf16.mxu0 %v1433
        %1509 = vmatmul.mubr.bf16.gmra.mrb[0].mxu0 %v1432
        %v1510 = vpop.f32.mrb[0].mxu0
        %v1511 = vadd.f32 0.0, %v1510
        %v1512 = vpop.f32.mrb[0].mxu0
        %v1513 = vpop.f32.mrb[0].mxu0
        %v1514 = vadd.f32 0.0, %v1513
        %v1515 = vpop.f32.mrb[0].mxu0
        %1516 = vmatprep.mubr.bf16.mxu0 %v1435
        %1517 = vmatmul.mubr.bf16.gmra.mrb[0].mxu0 %v1434
        %v1518 = vpop.f32.mrb[0].mxu0
        %v1519 = vadd.f32 0.0, %v1518
        %v1520 = vpop.f32.mrb[0].mxu0
        %v1521 = vpop.f32.mrb[0].mxu0
        %v1522 = vadd.f32 0.0, %v1521
        %v1523 = vpop.f32.mrb[0].mxu0
        %1524 = vmatprep.mubr.bf16.mxu0 %v1437
        %1525 = vmatmul.mubr.bf16.gmra.mrb[0].mxu0 %v1436
        %v1526 = vpop.f32.mrb[0].mxu0
        %v1527 = vadd.f32 0.0, %v1526
        %v1528 = vpop.f32.mrb[0].mxu0
        %v1529 = vpop.f32.mrb[0].mxu0
        %v1530 = vadd.f32 0.0, %v1529
        %v1531 = vpop.f32.mrb[0].mxu0
        %1532 = vmatprep.mubr.bf16.mxu0 %v1439
        %1533 = vmatmul.mubr.bf16.gmra.mrb[0].mxu0 %v1438
        %v1534 = vpop.f32.mrb[0].mxu0
        %v1535 = vadd.f32 0.0, %v1534
        %v1536 = vpop.f32.mrb[0].mxu0
        %v1537 = vpop.f32.mrb[0].mxu0
        %v1538 = vadd.f32 0.0, %v1537
        %v1539 = vpop.f32.mrb[0].mxu0
        %1540 = vmatprep.mubr.bf16.mxu0 %v1441
        %1541 = vmatmul.mubr.bf16.gmra.mrb[0].mxu0 %v1440
        %v1542 = vpop.f32.mrb[0].mxu0
        %v1543 = vadd.f32 0.0, %v1542
        %v1544 = vpop.f32.mrb[0].mxu0
        %v1545 = vpop.f32.mrb[0].mxu0
        %v1546 = vadd.f32 0.0, %v1545
        %v1547 = vpop.f32.mrb[0].mxu0
        %1548 = vmatprep.mubr.bf16.mxu0 %v1443
        %1549 = vmatmul.mubr.bf16.gmra.mrb[0].mxu0 %v1442
        %v1550 = vpop.f32.mrb[0].mxu0
        %v1551 = vadd.f32 0.0, %v1550
        %v1552 = vpop.f32.mrb[0].mxu0
        %v1553 = vpop.f32.mrb[0].mxu0
        %v1554 = vadd.f32 0.0, %v1553
        %v1555 = vpop.f32.mrb[0].mxu0
        %1556 = vmatprep.mubr.bf16.mxu0 %v1445
        %1557 = vmatmul.mubr.bf16.gmra.mrb[0].mxu0 %v1444
        %v1558 = vpop.f32.mrb[0].mxu0
        %v1559 = vadd.f32 0.0, %v1558
        %v1560 = vpop.f32.mrb[0].mxu0
        %v1561 = vpop.f32.mrb[0].mxu0
        %v1562 = vadd.f32 0.0, %v1561
        %v1563 = vpop.f32.mrb[0].mxu0
        %1564 = vmatprep.mubr.bf16.mxu0 %v1447
        %1565 = vmatmul.mubr.bf16.gmra.mrb[0].mxu0 %v1446
        %v1566 = vpop.f32.mrb[0].mxu0
        %v1567 = vadd.f32 0.0, %v1566
        %v1568 = vpop.f32.mrb[0].mxu0
        %v1569 = vpop.f32.mrb[0].mxu0
        %v1570 = vadd.f32 0.0, %v1569
        %v1571 = vpop.f32.mrb[0].mxu0
        %1572 = vmatprep.mubr.bf16.mxu0 %v1449
        %1573 = vmatmul.mubr.bf16.gmra.mrb[0].mxu0 %v1448
        %v1574 = vpop.f32.mrb[0].mxu0
        %v1575 = vadd.f32 0.0, %v1574
        %v1576 = vpop.f32.mrb[0].mxu0
        %v1577 = vpop.f32.mrb[0].mxu0
        %v1578 = vadd.f32 0.0, %v1577
        %v1579 = vpop.f32.mrb[0].mxu0
        %1580 = vmatprep.mubr.bf16.mxu0 %v1451
        %1581 = vmatmul.mubr.bf16.gmra.mrb[0].mxu0 %v1450
        %v1582 = vpop.f32.mrb[0].mxu0
        %v1583 = vadd.f32 0.0, %v1582
        %v1584 = vpop.f32.mrb[0].mxu0
        %v1585 = vpop.f32.mrb[0].mxu0
        %v1586 = vadd.f32 0.0, %v1585
        %v1587 = vpop.f32.mrb[0].mxu0
        %1588 = vmatprep.mubr.bf16.mxu0 %v1453
        %1589 = vmatmul.mubr.bf16.gmra.mrb[0].mxu0 %v1452
        %v1590 = vpop.f32.mrb[0].mxu0
        %v1591 = vadd.f32 0.0, %v1590
        %v1592 = vpop.f32.mrb[0].mxu0
        %v1593 = vpop.f32.mrb[0].mxu0
        %v1594 = vadd.f32 0.0, %v1593
        %v1595 = vpop.f32.mrb[0].mxu0
        %1596 = vmatprep.mubr.bf16.mxu0 %v1455
        %1597 = vmatmul.mubr.bf16.gmra.mrb[0].mxu0 %v1454
        %v1598 = vpop.f32.mrb[0].mxu0
        %v1599 = vadd.f32 0.0, %v1598
        %v1600 = vpop.f32.mrb[0].mxu0
        %v1601 = vpop.f32.mrb[0].mxu0
        %v1602 = vadd.f32 0.0, %v1601
        %v1603 = vpop.f32.mrb[0].mxu0
        %1604 = vmatprep.mubr.bf16.mxu0 %v1457
        %1605 = vmatmul.mubr.bf16.gmra.mrb[0].mxu0 %v1456
        %v1606 = vpop.f32.mrb[0].mxu0
        %v1607 = vadd.f32 0.0, %v1606
        %v1608 = vpop.f32.mrb[0].mxu0
        %v1609 = vpop.f32.mrb[0].mxu0
        %v1610 = vadd.f32 0.0, %v1609
        %v1611 = vpop.f32.mrb[0].mxu0
        %1612 = vmatprep.mubr.bf16.mxu0 %v1459
        %1613 = vmatmul.mubr.bf16.gmra.mrb[0].mxu0 %v1458
        %v1614 = vpop.f32.mrb[0].mxu0
        %v1615 = vadd.f32 0.0, %v1614
        %v1616 = vpop.f32.mrb[0].mxu0
        %v1617 = vpop.f32.mrb[0].mxu0
        %v1618 = vadd.f32 0.0, %v1617
        %v1619 = vpop.f32.mrb[0].mxu0
        %1620 = vdwg.mxu0
        %1621 = vxpose.xlu0.b32.start [1/16] %v1495, 128
        %1622 = vxpose.xlu0.b32.cont [2/16] %v1498, 128
        %1623 = vxpose.xlu0.b32.cont [3/16] %v1503, 128
        %1624 = vxpose.xlu0.b32.cont [4/16] %v1506, 128
        %1625 = vxpose.xlu0.b32.cont [5/16] %v1511, 128
        %1626 = vxpose.xlu0.b32.cont [6/16] %v1514, 128
        %1627 = vxpose.xlu0.b32.cont [7/16] %v1519, 128
        %1628 = vxpose.xlu0.b32.cont [8/16] %v1522, 128
        %1629 = vxpose.xlu0.b32.cont [9/16] %v1527, 128
        %1630 = vxpose.xlu0.b32.cont [10/16] %v1530, 128
        %1631 = vxpose.xlu0.b32.cont [11/16] %v1535, 128
        %1632 = vxpose.xlu0.b32.cont [12/16] %v1538, 128
        %1633 = vxpose.xlu0.b32.cont [13/16] %v1543, 128
        %1634 = vxpose.xlu0.b32.cont [14/16] %v1546, 128
        %1635 = vxpose.xlu0.b32.cont [15/16] %v1551, 128
        %1636 = vxpose.xlu0.b32.end [16/16] %v1554, 128
        %v1637 = vpop.trf.xlu0
        %v1638 = vpop.trf.xlu0
        %v1639 = vpop.trf.xlu0
        %v1640 = vpop.trf.xlu0
        %v1641 = vpop.trf.xlu0
        %v1642 = vpop.trf.xlu0
        %v1643 = vpop.trf.xlu0
        %v1644 = vpop.trf.xlu0
        %v1645 = vpop.trf.xlu0
        %v1646 = vpop.trf.xlu0
        %v1647 = vpop.trf.xlu0
        %v1648 = vpop.trf.xlu0
        %v1649 = vpop.trf.xlu0
        %v1650 = vpop.trf.xlu0
        %v1651 = vpop.trf.xlu0
        %v1652 = vpop.trf.xlu0
        %1653 = vxpose.xlu0.b32.start [1/16] %v1559, 128
        %1654 = vxpose.xlu0.b32.cont [2/16] %v1562, 128
        %1655 = vxpose.xlu0.b32.cont [3/16] %v1567, 128
        %1656 = vxpose.xlu0.b32.cont [4/16] %v1570, 128
        %1657 = vxpose.xlu0.b32.cont [5/16] %v1575, 128
        %1658 = vxpose.xlu0.b32.cont [6/16] %v1578, 128
        %1659 = vxpose.xlu0.b32.cont [7/16] %v1583, 128
        %1660 = vxpose.xlu0.b32.cont [8/16] %v1586, 128
        %1661 = vxpose.xlu0.b32.cont [9/16] %v1591, 128
        %1662 = vxpose.xlu0.b32.cont [10/16] %v1594, 128
        %1663 = vxpose.xlu0.b32.cont [11/16] %v1599, 128
        %1664 = vxpose.xlu0.b32.cont [12/16] %v1602, 128
        %1665 = vxpose.xlu0.b32.cont [13/16] %v1607, 128
        %1666 = vxpose.xlu0.b32.cont [14/16] %v1610, 128
        %1667 = vxpose.xlu0.b32.cont [15/16] %v1615, 128
        %1668 = vxpose.xlu0.b32.end [16/16] %v1618, 128
        %v1669 = vpop.trf.xlu0
        %v1670 = vpop.trf.xlu0
        %v1671 = vpop.trf.xlu0
        %v1672 = vpop.trf.xlu0
        %v1673 = vpop.trf.xlu0
        %v1674 = vpop.trf.xlu0
        %v1675 = vpop.trf.xlu0
        %v1676 = vpop.trf.xlu0
        %v1677 = vpop.trf.xlu0
        %v1678 = vpop.trf.xlu0
        %v1679 = vpop.trf.xlu0
        %v1680 = vpop.trf.xlu0
        %v1681 = vpop.trf.xlu0
        %v1682 = vpop.trf.xlu0
        %v1683 = vpop.trf.xlu0
        %v1684 = vpop.trf.xlu0
        %v1685 = vstv %s256
        %v1686 = vmul.f32 %v1685, %v1637
        %v1687 = vmul.f32 %v1685, %v1669
        %v1688 = vmul.f32 %v1685, %v1638
        %v1689 = vmul.f32 %v1685, %v1670
        %v1690 = vmul.f32 %v1685, %v1639
        %v1691 = vmul.f32 %v1685, %v1671
        %v1692 = vmul.f32 %v1685, %v1640
        %v1693 = vmul.f32 %v1685, %v1672
        %v1694 = vmul.f32 %v1685, %v1641
        %v1695 = vmul.f32 %v1685, %v1673
        %v1696 = vmul.f32 %v1685, %v1642
        %v1697 = vmul.f32 %v1685, %v1674
        %v1698 = vmul.f32 %v1685, %v1643
        %v1699 = vmul.f32 %v1685, %v1675
        %v1700 = vmul.f32 %v1685, %v1644
        %v1701 = vmul.f32 %v1685, %v1676
        %v1702 = vadd.f32 %v1686, %v282
        %v1703 = vadd.f32 %v1687, %v283
        %v1704 = vadd.f32 %v1688, %v284
        %v1705 = vadd.f32 %v1689, %v285
        %v1706 = vadd.f32 %v1690, %v286
        %v1707 = vadd.f32 %v1691, %v287
        %v1708 = vadd.f32 %v1692, %v288
        %v1709 = vadd.f32 %v1693, %v289
        %v1710 = vadd.f32 %v1694, %v290
        %v1711 = vadd.f32 %v1695, %v291
        %v1712 = vadd.f32 %v1696, %v292
        %v1713 = vadd.f32 %v1697, %v293
        %v1714 = vadd.f32 %v1698, %v294
        %v1715 = vadd.f32 %v1699, %v295
        %v1716 = vadd.f32 %v1700, %v296
        %v1717 = vadd.f32 %v1701, %v297
        %1718 = vst [vmem:[%s247] sm:$0xff] %v1702
        %1719 = vst [vmem:[%s247 + $0x8] sm:$0xff] %v1703
        %1720 = vst [vmem:[%s247 + $0x10] sm:$0xff] %v1704
        %1721 = vst [vmem:[%s247 + $0x18] sm:$0xff] %v1705
        %1722 = vst [vmem:[%s247 + $0x20] sm:$0xff] %v1706
        %1723 = vst [vmem:[%s247 + $0x28] sm:$0xff] %v1707
        %1724 = vst [vmem:[%s247 + $0x30] sm:$0xff] %v1708
        %1725 = vst [vmem:[%s247 + $0x38] sm:$0xff] %v1709
        %1726 = vst [vmem:[%s247 + $0x40] sm:$0xff] %v1710
        %1727 = vst [vmem:[%s247 + $0x48] sm:$0xff] %v1711
        %1728 = vst [vmem:[%s247 + $0x50] sm:$0xff] %v1712
        %1729 = vst [vmem:[%s247 + $0x58] sm:$0xff] %v1713
        %1730 = vst [vmem:[%s247 + $0x60] sm:$0xff] %v1714
        %1731 = vst [vmem:[%s247 + $0x68] sm:$0xff] %v1715
        %1732 = vst [vmem:[%s247 + $0x70] sm:$0xff] %v1716
        %1733 = vst [vmem:[%s247 + $0x78] sm:$0xff] %v1717
        %s1734 = sand.u32 %s124, 1
        %s1735 = scalar_lea.sflag [#allocation5], %s1734
        %s1736 = sand.u32 %s124, 1
        %s1737 = smul.addr %s1736, 128
        %s1738 = scalar_lea.vmem [#allocation6], %s1737
        %s1739 = sand.u32 %s150, 1
        %s1740 = scalar_lea.sflag [#allocation8], %s1739
        %s1741 = sand.u32 %s150, 1
        %s1742 = smul.addr %s1741, 512
        %s1743 = scalar_lea.vmem [#allocation7], %s1742
        // Predicated region
        $region41: #{tpu_custom_call.1} parent=35 // pred_check
          %p1744 = pneg %p134
        $region42: #{tpu_custom_call.1} parent=35 // pred_check_branch
          %1746 = sbr.rel (%p1744) target = $region44
        $region43: #{tpu_custom_call.1} parent=35 // pred_region
          %s1748 = ssub.s32 2048, 2048
          %1749 = vsyncadd %s1735, %s1748
          %s1750 = smul.addr %s27, 16
          %s1751 = smul.addr %s1750, 128
          %s1752 = scalar_lea.hbm %s4, %s1751
          %s1753 = sshll.u32 %s1738, 4
          %s1754 = int_to_ptr.vmem [resolvable:$true] %s1753
          %1759 = dma.vmem_to_hbm [thread:$0]  %s1754, 2048, %s1752, %s1735, 256, 256, 16
        $region44: #{tpu_custom_call.1} parent=35 // pred_fallthru
          _
        // Predicated region
        $region45: #{tpu_custom_call.1} parent=35 // pred_check
          %p1760 = pneg %p160
        $region46: #{tpu_custom_call.1} parent=35 // pred_check_branch
          %1762 = sbr.rel (%p1760) target = $region48
        $region47: #{tpu_custom_call.1} parent=35 // pred_region
          %s1764 = ssub.s32 8192, 8192
          %1765 = vsyncadd %s1740, %s1764
          %s1766 = smul.addr %s27, 64
          %s1767 = smul.addr %s1766, 128
          %s1768 = scalar_lea.hbm %s5, %s1767
          %s1769 = sshll.u32 %s1743, 4
          %s1770 = int_to_ptr.vmem [resolvable:$true] %s1769
          %1775 = dma.vmem_to_hbm [thread:$0]  %s1770, 8192, %s1768, %s1740, 256, 256, 16
        $region48: #{tpu_custom_call.1} parent=35 // pred_fallthru
          _
      $region36: #{tpu_custom_call.1} parent=5 // pred_fallthru
        _
      %p1776 = scmp.le.s32.totalorder 2, %s22
      // Predicated region
      $region49: #{tpu_custom_call.1} parent=5 // pred_check
        %p1777 = pneg %p1776
      $region50: #{tpu_custom_call.1} parent=5 // pred_check_branch
        %1779 = sbr.rel (%p1777) target = $region52
      $region51: #{tpu_custom_call.1} parent=5 // pred_region
        %s1780 = ssub.s32 %s22, 2
        // Predicated region
        $region53: #{tpu_custom_call.1} parent=51 // pred_check
          %p1781 = pneg %p140
        $region54: #{tpu_custom_call.1} parent=51 // pred_check_branch
          %1783 = sbr.rel (%p1781) target = $region56
        $region55: #{tpu_custom_call.1} parent=51 // pred_region
          %s1784 = sand.u32 %s125, 1
          %s1785 = scalar_lea.sflag [#allocation5], %s1784
          %s1786 = sand.u32 %s125, 1
          %s1787 = smul.addr %s1786, 128
          %s1788 = scalar_lea.vmem [#allocation6], %s1787
          %1789 = dma.done %s1785, 2048
        $region56: #{tpu_custom_call.1} parent=51 // pred_fallthru
          _
        // Predicated region
        $region57: #{tpu_custom_call.1} parent=51 // pred_check
          %p1790 = pneg %p166
        $region58: #{tpu_custom_call.1} parent=51 // pred_check_branch
          %1792 = sbr.rel (%p1790) target = $region60
        $region59: #{tpu_custom_call.1} parent=51 // pred_region
          %s1793 = sand.u32 %s151, 1
          %s1794 = scalar_lea.sflag [#allocation8], %s1793
          %s1795 = sand.u32 %s151, 1
          %s1796 = smul.addr %s1795, 512
          %s1797 = scalar_lea.vmem [#allocation7], %s1796
          %1798 = dma.done %s1794, 8192
        $region60: #{tpu_custom_call.1} parent=51 // pred_fallthru
          _
      $region52: #{tpu_custom_call.1} parent=5 // pred_fallthru
        _
    $region6: #{tpu_custom_call.1} parent=1 // loop_footer
      %s26 = sadd.s32 1, %s22
    $region7: #{tpu_custom_call.1} parent=1 // loop_footer_branch
      %21 = sbr.rel target = $region3
    $region8: #{tpu_custom_call.1} parent=1 // loop_exit
      _
    %1799 = vsyncpa [#allocation4], 1
    %s1800 = scalar_lea.sflag [#allocation4], 1
    %1801 = vsyncpa %s1800, 1
    %1802 = vsyncpa [#allocation5], 1
    %s1803 = scalar_lea.sflag [#allocation5], 1
    %1804 = vsyncpa %s1803, 1
    %1805 = vsyncpa [#allocation8], 1
    %s1806 = scalar_lea.sflag [#allocation8], 1
    %1807 = vsyncpa %s1806, 1

</llo_original>
